<compile_context>
chip_gen: v7x
topology: tpu7x:2x2x1
jax: 0.10.0
libtpu: 0.0.40
codegen_flags: <defaults>
</compile_context>

<pallas_src>
import functools

import jax
import jax.numpy as jnp
from jax.experimental import pallas as pl
from jax.experimental.pallas import tpu as pltpu

LANE = 128                        # TPU lane width: pad feature dims to this
MXU_DTYPE = jnp.bfloat16          # MXU operand dtype (f32 accumulation).
                                  # Set to jnp.float32 for bit-exact f32 math.


def _round_up(v, m):
    return ((v + m - 1) // m) * m


def _vmem():
    # whole-array block resident in VMEM (single grid point, tiny shapes)
    return pl.BlockSpec(memory_space=pltpu.MemorySpace.VMEM)


# ----------------------------- fused kernel --------------------------------

def _fused_forward_kernel(
    x_ref, a_ref, pool_ref,
    lin1_w_ref, lin1_b_ref,
    gnn_w_ref, gnn_b_ref,
    cell_w_ref, cell_b_ref,
    ro_w_ref, ro_b_ref,
    cls_w_ref, cls_b_ref,
    o_ref,
    *, num_blocks, num_cells):
    """Entire NetworkGNN forward; every intermediate stays in VMEM/vregs."""
    npc = num_blocks // num_cells

    def mdot(lhs, rhs):
        # MXU matmul with bf16 operands, f32 accumulation.
        return jnp.dot(lhs.astype(MXU_DTYPE), rhs.astype(MXU_DTYPE),
                       preferred_element_type=jnp.float32)

    a = a_ref[...]                     # dense GCN-normalized adjacency (N, N)

    # x = relu(lin1(x)); dropout is identity in eval mode.
    # TODO(synk): F.dropout only implemented as eval-mode identity (training path omitted).
    x = jnp.maximum(mdot(x_ref[...], lin1_w_ref[...]) + lin1_b_ref[...], 0.0)

    features = [x]
    for cell in range(num_cells):
        for node in range(npc + 1):
            # skip_op = 'identity'; LaOp('sum') = relu(sum of inputs).
            if node == 0:
                tmp = features[0]          # single post-ReLU input -> identity
            else:
                s = features[0]
                for i in range(1, node + 1):
                    s = s + features[i]
                tmp = jnp.maximum(s, 0.0)

            if node == npc:
                # cell_output_lin + relu
                w = cell_w_ref[cell]
                b = cell_b_ref[cell]
                x = jnp.maximum(mdot(tmp, w) + b, 0.0)
            else:
                # GCNConv: A_norm @ (X W) + b, then relu (args.BN=LN=False)
                agg_id = cell * npc + node
                w = gnn_w_ref[agg_id]
                b = gnn_b_ref[agg_id]
                xw = mdot(tmp, w)
                x = jnp.maximum(mdot(a, xw) + b, 0.0)
            features.append(x)
        features = [x]

    # ReadoutOp('global_mean') -> readout_lin + relu -> classifier.
    pooled = mdot(pool_ref[...], x)
    out = jnp.maximum(mdot(pooled, ro_w_ref[...]) + ro_b_ref[...], 0.0)
    out = mdot(out, cls_w_ref[...]) + cls_b_ref[...]
    o_ref[...] = out.astype(o_ref.dtype)


# ------------------------- parameters & padding ----------------------------

def _lin_init(key, fan_in, fan_out):
    k1, k2 = jax.random.split(key)
    w = jax.random.normal(k1, (fan_in, fan_out), jnp.float32) / jnp.sqrt(
        jnp.float32(fan_in))
    b = jax.random.normal(k2, (fan_out,), jnp.float32) * 0.01
    return w, b


def init_params(key, in_dim, hidden, out_dim, num_blocks, num_cells):
    keys = jax.random.split(key, 4 + num_blocks + num_cells)
    return {
        "lin1": _lin_init(keys[0], in_dim, hidden),
        "gnn": [_lin_init(keys[1 + i], hidden, hidden) for i in range(num_blocks)],
        "cell_out": [_lin_init(keys[1 + num_blocks + i], hidden, hidden)
                     for i in range(num_cells)],
        "readout_lin": _lin_init(keys[1 + num_blocks + num_cells], hidden, hidden),
        "classifier": _lin_init(keys[2 + num_blocks + num_cells], hidden, out_dim),
    }


def prepare_padded_params(params, in_dim, hidden, out_dim):
    """Zero-pad feature dims to 128 lanes, stack per-layer weights/biases once.

    NOTE: only jnp arrays are stored here (no Python-int "dims"); padded lane
    sizes are recovered from the array shapes inside the traced forward, so the
    pytree is safe to pass straight into jax.jit.
    """
    ip = _round_up(in_dim, LANE)
    hp = _round_up(hidden, LANE)
    op = _round_up(out_dim, LANE)

    def pad_w(w, rows, cols):
        return jnp.pad(w, ((0, rows - w.shape[0]), (0, cols - w.shape[1])))

    def pad_b(b, cols):
        return jnp.pad(b, (0, cols - b.shape[0])).reshape(1, cols)

    lin1_w, lin1_b = params["lin1"]
    ro_w, ro_b = params["readout_lin"]
    cls_w, cls_b = params["classifier"]

    return {
        "lin1_w": pad_w(lin1_w, ip, hp).astype(MXU_DTYPE),
        "lin1_b": pad_b(lin1_b, hp),
        "gnn_w": jnp.stack([pad_w(w, hp, hp) for w, _ in params["gnn"]]
                           ).astype(MXU_DTYPE),               # (num_blocks, hp, hp)
        "gnn_b": jnp.stack([pad_b(b, hp) for _, b in params["gnn"]]),  # (nb, 1, hp)
        "cell_w": jnp.stack([pad_w(w, hp, hp) for w, _ in params["cell_out"]]
                            ).astype(MXU_DTYPE),              # (num_cells, hp, hp)
        "cell_b": jnp.stack([pad_b(b, hp) for _, b in params["cell_out"]]),
        "ro_w": pad_w(ro_w, hp, hp).astype(MXU_DTYPE),
        "ro_b": pad_b(ro_b, hp),
        "cls_w": pad_w(cls_w, hp, op).astype(MXU_DTYPE),
        "cls_b": pad_b(cls_b, op),
    }


# ------------------------------- forward -----------------------------------

def network_gnn_forward(padded, x, a_norm, pool_mat, *,
                        num_blocks, num_cells, out_dim):
    # Padded lane dims come from STATIC array shapes (jit-safe).
    ip = padded["lin1_w"].shape[0]
    op = padded["cls_w"].shape[1]
    g = pool_mat.shape[0]

    x_pad = jnp.pad(x, ((0, 0), (0, ip - x.shape[1]))).astype(MXU_DTYPE)
    a_mxu = a_norm.astype(MXU_DTYPE)
    pool_mxu = pool_mat.astype(MXU_DTYPE)

    kernel = functools.partial(_fused_forward_kernel,
                               num_blocks=num_blocks, num_cells=num_cells)
    out_pad = pl.pallas_call(
        kernel,
        out_shape=jax.ShapeDtypeStruct((g, op), jnp.float32),
        in_specs=[_vmem()] * 13,
        out_specs=_vmem(),
    )(x_pad, a_mxu, pool_mxu,
      padded["lin1_w"], padded["lin1_b"],
      padded["gnn_w"], padded["gnn_b"],
      padded["cell_w"], padded["cell_b"],
      padded["ro_w"], padded["ro_b"],
      padded["cls_w"], padded["cls_b"])
    return out_pad[:, :out_dim]


def reference_forward(params, x, a_norm, pool_mat, *, num_blocks, num_cells):
    """Pure-JAX f32 reference mirroring the PyTorch forward (for sanity check)."""
    npc = num_blocks // num_cells
    w, b = params["lin1"]
    x = jax.nn.relu(x @ w + b)
    features = [x]
    for cell in range(num_cells):
        for node in range(npc + 1):
            tmp = jax.nn.relu(sum(features[:node + 1]))
            if node == npc:
                cw, cb = params["cell_out"][cell]
                x = jax.nn.relu(tmp @ cw + cb)
            else:
                gw, gb = params["gnn"][cell * npc + node]
                x = jax.nn.relu(a_norm @ (tmp @ gw) + gb)
            features.append(x)
        features = [x]
    out = pool_mat @ x
    rw, rb = params["readout_lin"]
    out = jax.nn.relu(out @ rw + rb)
    cw, cb = params["classifier"]
    return out @ cw + cb


# --------------------------------- main ------------------------------------

if __name__ == "__main__":
    key = jax.random.PRNGKey(0)
    k_x, k_p = jax.random.split(key)

    N, in_dim, hidden, out_dim = 16, 16, 32, 8
    num_blocks, num_cells = 4, 2
    num_graphs = 2
    per = N // num_graphs

    x = jax.random.normal(k_x, (N, in_dim), jnp.float32)

    # deterministic edge_index: per-graph ring (both directions) + one chord
    src, dst = [], []
    for g in range(num_graphs):
        base = g * per
        for i in range(per):
            a_, b_ = base + i, base + (i + 1) % per
            src += [a_, b_]
            dst += [b_, a_]
        src += [base, base + per // 2]
        dst += [base + per // 2, base]
    edge_index = jnp.array([src, dst], dtype=jnp.int32)
    batch = jnp.repeat(jnp.arange(num_graphs, dtype=jnp.int32), per)

    # dense GCN-normalized adjacency (host-side glue, plain JAX)
    A = jnp.zeros((N, N), jnp.float32).at[edge_index[0], edge_index[1]].set(1.0)
    A = A + jnp.eye(N, dtype=jnp.float32)
    dinv = 1.0 / jnp.sqrt(A.sum(axis=1))
    a_norm = A * dinv[:, None] * dinv[None, :]

    # mean-pool matrix [G, N]
    onehot = (batch[None, :] == jnp.arange(num_graphs)[:, None]).astype(jnp.float32)
    pool_mat = onehot / onehot.sum(axis=1, keepdims=True)

    params = init_params(k_p, in_dim, hidden, out_dim, num_blocks, num_cells)
    padded = prepare_padded_params(params, in_dim, hidden, out_dim)

    fwd = jax.jit(functools.partial(network_gnn_forward,
                                    num_blocks=num_blocks,
                                    num_cells=num_cells,
                                    out_dim=out_dim))
    out = jax.block_until_ready(fwd(padded, x, a_norm, pool_mat))
    assert out.shape == (num_graphs, out_dim) and out.dtype == jnp.float32

    # sanity check vs. pure-JAX f32 reference (loose tolerance for bf16 MXU ops)
    ref = reference_forward(params, x, a_norm, pool_mat,
                            num_blocks=num_blocks, num_cells=num_cells)
    err = float(jnp.max(jnp.abs(out - ref)))
    scale = float(jnp.max(jnp.abs(ref))) + 1e-6
    assert err <= 0.08 * scale, f"mismatch: max_abs_err={err}, scale={scale}"

    print("KERNEL_OK")
</pallas_src>

<mosaic_0001>
module attributes {stable_mosaic.version = 11 : i64} {
  func.func @_fused_forward_kernel(%arg0: memref<16x128xbf16, #tpu.memory_space<vmem>>, %arg1: memref<16x16xbf16, #tpu.memory_space<vmem>>, %arg2: memref<2x16xbf16, #tpu.memory_space<vmem>>, %arg3: memref<128x128xbf16, #tpu.memory_space<vmem>>, %arg4: memref<1x128xf32, #tpu.memory_space<vmem>>, %arg5: memref<4x128x128xbf16, #tpu.memory_space<vmem>>, %arg6: memref<4x1x128xf32, #tpu.memory_space<vmem>>, %arg7: memref<2x128x128xbf16, #tpu.memory_space<vmem>>, %arg8: memref<2x1x128xf32, #tpu.memory_space<vmem>>, %arg9: memref<128x128xbf16, #tpu.memory_space<vmem>>, %arg10: memref<1x128xf32, #tpu.memory_space<vmem>>, %arg11: memref<128x128xbf16, #tpu.memory_space<vmem>>, %arg12: memref<1x128xf32, #tpu.memory_space<vmem>>, %arg13: memref<2x128xf32, #tpu.memory_space<vmem>>) attributes {dimension_semantics = [], scalar_prefetch = 0 : i64, scratch_operands = 0 : i64, tpu.core_type = #tpu.core_type<tc>} {
    %c0 = arith.constant 0 : index
    %c0_0 = arith.constant 0 : index
    %0 = vector.load %arg1[%c0, %c0_0] : memref<16x16xbf16, #tpu.memory_space<vmem>>, vector<16x16xbf16>
    %c0_1 = arith.constant 0 : index
    %c0_2 = arith.constant 0 : index
    %1 = vector.load %arg0[%c0_1, %c0_2] : memref<16x128xbf16, #tpu.memory_space<vmem>>, vector<16x128xbf16>
    %c0_3 = arith.constant 0 : index
    %c0_4 = arith.constant 0 : index
    %2 = vector.load %arg3[%c0_3, %c0_4] : memref<128x128xbf16, #tpu.memory_space<vmem>>, vector<128x128xbf16>
    %cst = arith.constant dense<0.000000e+00> : vector<16x128xf32>
    %3 = tpu.matmul %1, %2, %cst {dimension_numbers = #tpu.dot_dimension_numbers<[1], [0], [0], [1], [0, 0, 1, 1], [], []>} : vector<16x128xbf16>, vector<128x128xbf16>, vector<16x128xf32> -> vector<16x128xf32>
    %c0_5 = arith.constant 0 : index
    %c0_6 = arith.constant 0 : index
    %4 = vector.load %arg4[%c0_5, %c0_6] : memref<1x128xf32, #tpu.memory_space<vmem>>, vector<1x128xf32>
    %5 = vector.broadcast %4 : vector<1x128xf32> to vector<16x128xf32>
    %6 = arith.addf %3, %5 : vector<16x128xf32>
    %cst_7 = arith.constant 0.000000e+00 : f32
    %7 = vector.broadcast %cst_7 : f32 to vector<16x128xf32>
    %8 = arith.maximumf %6, %7 : vector<16x128xf32>
    %c0_8 = arith.constant 0 : index
    %c0_9 = arith.constant 0 : index
    %c0_10 = arith.constant 0 : index
    %9 = vector.load %arg5[%c0_8, %c0_9, %c0_10] : memref<4x128x128xbf16, #tpu.memory_space<vmem>>, vector<1x128x128xbf16>
    %10 = vector.shape_cast %9 : vector<1x128x128xbf16> to vector<128x128xbf16>
    %c0_11 = arith.constant 0 : index
    %c0_12 = arith.constant 0 : index
    %c0_13 = arith.constant 0 : index
    %11 = vector.load %arg6[%c0_11, %c0_12, %c0_13] : memref<4x1x128xf32, #tpu.memory_space<vmem>>, vector<1x1x128xf32>
    %12 = vector.shape_cast %11 : vector<1x1x128xf32> to vector<1x128xf32>
    %13 = arith.truncf %8 : vector<16x128xf32> to vector<16x128xbf16>
    %cst_14 = arith.constant dense<0.000000e+00> : vector<16x128xf32>
    %14 = tpu.matmul %13, %10, %cst_14 {dimension_numbers = #tpu.dot_dimension_numbers<[1], [0], [0], [1], [0, 0, 1, 1], [], []>} : vector<16x128xbf16>, vector<128x128xbf16>, vector<16x128xf32> -> vector<16x128xf32>
    %15 = arith.truncf %14 : vector<16x128xf32> to vector<16x128xbf16>
    %cst_15 = arith.constant dense<0.000000e+00> : vector<16x128xf32>
    %16 = tpu.matmul %0, %15, %cst_15 {dimension_numbers = #tpu.dot_dimension_numbers<[1], [0], [0], [1], [0, 0, 1, 1], [], []>} : vector<16x16xbf16>, vector<16x128xbf16>, vector<16x128xf32> -> vector<16x128xf32>
    %17 = vector.broadcast %12 : vector<1x128xf32> to vector<16x128xf32>
    %18 = arith.addf %16, %17 : vector<16x128xf32>
    %cst_16 = arith.constant 0.000000e+00 : f32
    %19 = vector.broadcast %cst_16 : f32 to vector<16x128xf32>
    %20 = arith.maximumf %18, %19 : vector<16x128xf32>
    %21 = arith.addf %8, %20 : vector<16x128xf32>
    %cst_17 = arith.constant 0.000000e+00 : f32
    %22 = vector.broadcast %cst_17 : f32 to vector<16x128xf32>
    %23 = arith.maximumf %21, %22 : vector<16x128xf32>
    %c1 = arith.constant 1 : index
    %c0_18 = arith.constant 0 : index
    %c0_19 = arith.constant 0 : index
    %24 = vector.load %arg5[%c1, %c0_18, %c0_19] : memref<4x128x128xbf16, #tpu.memory_space<vmem>>, vector<1x128x128xbf16>
    %25 = vector.shape_cast %24 : vector<1x128x128xbf16> to vector<128x128xbf16>
    %c1_20 = arith.constant 1 : index
    %c0_21 = arith.constant 0 : index
    %c0_22 = arith.constant 0 : index
    %26 = vector.load %arg6[%c1_20, %c0_21, %c0_22] : memref<4x1x128xf32, #tpu.memory_space<vmem>>, vector<1x1x128xf32>
    %27 = vector.shape_cast %26 : vector<1x1x128xf32> to vector<1x128xf32>
    %28 = arith.truncf %23 : vector<16x128xf32> to vector<16x128xbf16>
    %cst_23 = arith.constant dense<0.000000e+00> : vector<16x128xf32>
    %29 = tpu.matmul %28, %25, %cst_23 {dimension_numbers = #tpu.dot_dimension_numbers<[1], [0], [0], [1], [0, 0, 1, 1], [], []>} : vector<16x128xbf16>, vector<128x128xbf16>, vector<16x128xf32> -> vector<16x128xf32>
    %30 = arith.truncf %29 : vector<16x128xf32> to vector<16x128xbf16>
    %cst_24 = arith.constant dense<0.000000e+00> : vector<16x128xf32>
    %31 = tpu.matmul %0, %30, %cst_24 {dimension_numbers = #tpu.dot_dimension_numbers<[1], [0], [0], [1], [0, 0, 1, 1], [], []>} : vector<16x16xbf16>, vector<16x128xbf16>, vector<16x128xf32> -> vector<16x128xf32>
    %32 = vector.broadcast %27 : vector<1x128xf32> to vector<16x128xf32>
    %33 = arith.addf %31, %32 : vector<16x128xf32>
    %cst_25 = arith.constant 0.000000e+00 : f32
    %34 = vector.broadcast %cst_25 : f32 to vector<16x128xf32>
    %35 = arith.maximumf %33, %34 : vector<16x128xf32>
    %36 = arith.addf %8, %20 : vector<16x128xf32>
    %37 = arith.addf %36, %35 : vector<16x128xf32>
    %cst_26 = arith.constant 0.000000e+00 : f32
    %38 = vector.broadcast %cst_26 : f32 to vector<16x128xf32>
    %39 = arith.maximumf %37, %38 : vector<16x128xf32>
    %c0_27 = arith.constant 0 : index
    %c0_28 = arith.constant 0 : index
    %c0_29 = arith.constant 0 : index
    %40 = vector.load %arg7[%c0_27, %c0_28, %c0_29] : memref<2x128x128xbf16, #tpu.memory_space<vmem>>, vector<1x128x128xbf16>
    %41 = vector.shape_cast %40 : vector<1x128x128xbf16> to vector<128x128xbf16>
    %c0_30 = arith.constant 0 : index
    %c0_31 = arith.constant 0 : index
    %c0_32 = arith.constant 0 : index
    %42 = vector.load %arg8[%c0_30, %c0_31, %c0_32] : memref<2x1x128xf32, #tpu.memory_space<vmem>>, vector<1x1x128xf32>
    %43 = vector.shape_cast %42 : vector<1x1x128xf32> to vector<1x128xf32>
    %44 = arith.truncf %39 : vector<16x128xf32> to vector<16x128xbf16>
    %cst_33 = arith.constant dense<0.000000e+00> : vector<16x128xf32>
    %45 = tpu.matmul %44, %41, %cst_33 {dimension_numbers = #tpu.dot_dimension_numbers<[1], [0], [0], [1], [0, 0, 1, 1], [], []>} : vector<16x128xbf16>, vector<128x128xbf16>, vector<16x128xf32> -> vector<16x128xf32>
    %46 = vector.broadcast %43 : vector<1x128xf32> to vector<16x128xf32>
    %47 = arith.addf %45, %46 : vector<16x128xf32>
    %cst_34 = arith.constant 0.000000e+00 : f32
    %48 = vector.broadcast %cst_34 : f32 to vector<16x128xf32>
    %49 = arith.maximumf %47, %48 : vector<16x128xf32>
    %c2 = arith.constant 2 : index
    %c0_35 = arith.constant 0 : index
    %c0_36 = arith.constant 0 : index
    %50 = vector.load %arg5[%c2, %c0_35, %c0_36] : memref<4x128x128xbf16, #tpu.memory_space<vmem>>, vector<1x128x128xbf16>
    %51 = vector.shape_cast %50 : vector<1x128x128xbf16> to vector<128x128xbf16>
    %c2_37 = arith.constant 2 : index
    %c0_38 = arith.constant 0 : index
    %c0_39 = arith.constant 0 : index
    %52 = vector.load %arg6[%c2_37, %c0_38, %c0_39] : memref<4x1x128xf32, #tpu.memory_space<vmem>>, vector<1x1x128xf32>
    %53 = vector.shape_cast %52 : vector<1x1x128xf32> to vector<1x128xf32>
    %54 = arith.truncf %49 : vector<16x128xf32> to vector<16x128xbf16>
    %cst_40 = arith.constant dense<0.000000e+00> : vector<16x128xf32>
    %55 = tpu.matmul %54, %51, %cst_40 {dimension_numbers = #tpu.dot_dimension_numbers<[1], [0], [0], [1], [0, 0, 1, 1], [], []>} : vector<16x128xbf16>, vector<128x128xbf16>, vector<16x128xf32> -> vector<16x128xf32>
    %56 = arith.truncf %55 : vector<16x128xf32> to vector<16x128xbf16>
    %cst_41 = arith.constant dense<0.000000e+00> : vector<16x128xf32>
    %57 = tpu.matmul %0, %56, %cst_41 {dimension_numbers = #tpu.dot_dimension_numbers<[1], [0], [0], [1], [0, 0, 1, 1], [], []>} : vector<16x16xbf16>, vector<16x128xbf16>, vector<16x128xf32> -> vector<16x128xf32>
    %58 = vector.broadcast %53 : vector<1x128xf32> to vector<16x128xf32>
    %59 = arith.addf %57, %58 : vector<16x128xf32>
    %cst_42 = arith.constant 0.000000e+00 : f32
    %60 = vector.broadcast %cst_42 : f32 to vector<16x128xf32>
    %61 = arith.maximumf %59, %60 : vector<16x128xf32>
    %62 = arith.addf %49, %61 : vector<16x128xf32>
    %cst_43 = arith.constant 0.000000e+00 : f32
    %63 = vector.broadcast %cst_43 : f32 to vector<16x128xf32>
    %64 = arith.maximumf %62, %63 : vector<16x128xf32>
    %c3 = arith.constant 3 : index
    %c0_44 = arith.constant 0 : index
    %c0_45 = arith.constant 0 : index
    %65 = vector.load %arg5[%c3, %c0_44, %c0_45] : memref<4x128x128xbf16, #tpu.memory_space<vmem>>, vector<1x128x128xbf16>
    %66 = vector.shape_cast %65 : vector<1x128x128xbf16> to vector<128x128xbf16>
    %c3_46 = arith.constant 3 : index
    %c0_47 = arith.constant 0 : index
    %c0_48 = arith.constant 0 : index
    %67 = vector.load %arg6[%c3_46, %c0_47, %c0_48] : memref<4x1x128xf32, #tpu.memory_space<vmem>>, vector<1x1x128xf32>
    %68 = vector.shape_cast %67 : vector<1x1x128xf32> to vector<1x128xf32>
    %69 = arith.truncf %64 : vector<16x128xf32> to vector<16x128xbf16>
    %cst_49 = arith.constant dense<0.000000e+00> : vector<16x128xf32>
    %70 = tpu.matmul %69, %66, %cst_49 {dimension_numbers = #tpu.dot_dimension_numbers<[1], [0], [0], [1], [0, 0, 1, 1], [], []>} : vector<16x128xbf16>, vector<128x128xbf16>, vector<16x128xf32> -> vector<16x128xf32>
    %71 = arith.truncf %70 : vector<16x128xf32> to vector<16x128xbf16>
    %cst_50 = arith.constant dense<0.000000e+00> : vector<16x128xf32>
    %72 = tpu.matmul %0, %71, %cst_50 {dimension_numbers = #tpu.dot_dimension_numbers<[1], [0], [0], [1], [0, 0, 1, 1], [], []>} : vector<16x16xbf16>, vector<16x128xbf16>, vector<16x128xf32> -> vector<16x128xf32>
    %73 = vector.broadcast %68 : vector<1x128xf32> to vector<16x128xf32>
    %74 = arith.addf %72, %73 : vector<16x128xf32>
    %cst_51 = arith.constant 0.000000e+00 : f32
    %75 = vector.broadcast %cst_51 : f32 to vector<16x128xf32>
    %76 = arith.maximumf %74, %75 : vector<16x128xf32>
    %77 = arith.addf %49, %61 : vector<16x128xf32>
    %78 = arith.addf %77, %76 : vector<16x128xf32>
    %cst_52 = arith.constant 0.000000e+00 : f32
    %79 = vector.broadcast %cst_52 : f32 to vector<16x128xf32>
    %80 = arith.maximumf %78, %79 : vector<16x128xf32>
    %c1_53 = arith.constant 1 : index
    %c0_54 = arith.constant 0 : index
    %c0_55 = arith.constant 0 : index
    %81 = vector.load %arg7[%c1_53, %c0_54, %c0_55] : memref<2x128x128xbf16, #tpu.memory_space<vmem>>, vector<1x128x128xbf16>
    %82 = vector.shape_cast %81 : vector<1x128x128xbf16> to vector<128x128xbf16>
    %c1_56 = arith.constant 1 : index
    %c0_57 = arith.constant 0 : index
    %c0_58 = arith.constant 0 : index
    %83 = vector.load %arg8[%c1_56, %c0_57, %c0_58] : memref<2x1x128xf32, #tpu.memory_space<vmem>>, vector<1x1x128xf32>
    %84 = vector.shape_cast %83 : vector<1x1x128xf32> to vector<1x128xf32>
    %85 = arith.truncf %80 : vector<16x128xf32> to vector<16x128xbf16>
    %cst_59 = arith.constant dense<0.000000e+00> : vector<16x128xf32>
    %86 = tpu.matmul %85, %82, %cst_59 {dimension_numbers = #tpu.dot_dimension_numbers<[1], [0], [0], [1], [0, 0, 1, 1], [], []>} : vector<16x128xbf16>, vector<128x128xbf16>, vector<16x128xf32> -> vector<16x128xf32>
    %87 = vector.broadcast %84 : vector<1x128xf32> to vector<16x128xf32>
    %88 = arith.addf %86, %87 : vector<16x128xf32>
    %cst_60 = arith.constant 0.000000e+00 : f32
    %89 = vector.broadcast %cst_60 : f32 to vector<16x128xf32>
    %90 = arith.maximumf %88, %89 : vector<16x128xf32>
    %c0_61 = arith.constant 0 : index
    %c0_62 = arith.constant 0 : index
    %91 = vector.load %arg2[%c0_61, %c0_62] : memref<2x16xbf16, #tpu.memory_space<vmem>>, vector<2x16xbf16>
    %92 = arith.truncf %90 : vector<16x128xf32> to vector<16x128xbf16>
    %cst_63 = arith.constant dense<0.000000e+00> : vector<2x128xf32>
    %93 = tpu.matmul %91, %92, %cst_63 {dimension_numbers = #tpu.dot_dimension_numbers<[1], [0], [0], [1], [0, 0, 1, 1], [], []>} : vector<2x16xbf16>, vector<16x128xbf16>, vector<2x128xf32> -> vector<2x128xf32>
    %c0_64 = arith.constant 0 : index
    %c0_65 = arith.constant 0 : index
    %94 = vector.load %arg9[%c0_64, %c0_65] : memref<128x128xbf16, #tpu.memory_space<vmem>>, vector<128x128xbf16>
    %95 = arith.truncf %93 : vector<2x128xf32> to vector<2x128xbf16>
    %cst_66 = arith.constant dense<0.000000e+00> : vector<2x128xf32>
    %96 = tpu.matmul %95, %94, %cst_66 {dimension_numbers = #tpu.dot_dimension_numbers<[1], [0], [0], [1], [0, 0, 1, 1], [], []>} : vector<2x128xbf16>, vector<128x128xbf16>, vector<2x128xf32> -> vector<2x128xf32>
    %c0_67 = arith.constant 0 : index
    %c0_68 = arith.constant 0 : index
    %97 = vector.load %arg10[%c0_67, %c0_68] : memref<1x128xf32, #tpu.memory_space<vmem>>, vector<1x128xf32>
    %98 = vector.broadcast %97 : vector<1x128xf32> to vector<2x128xf32>
    %99 = arith.addf %96, %98 : vector<2x128xf32>
    %cst_69 = arith.constant 0.000000e+00 : f32
    %100 = vector.broadcast %cst_69 : f32 to vector<2x128xf32>
    %101 = arith.maximumf %99, %100 : vector<2x128xf32>
    %c0_70 = arith.constant 0 : index
    %c0_71 = arith.constant 0 : index
    %102 = vector.load %arg11[%c0_70, %c0_71] : memref<128x128xbf16, #tpu.memory_space<vmem>>, vector<128x128xbf16>
    %103 = arith.truncf %101 : vector<2x128xf32> to vector<2x128xbf16>
    %cst_72 = arith.constant dense<0.000000e+00> : vector<2x128xf32>
    %104 = tpu.matmul %103, %102, %cst_72 {dimension_numbers = #tpu.dot_dimension_numbers<[1], [0], [0], [1], [0, 0, 1, 1], [], []>} : vector<2x128xbf16>, vector<128x128xbf16>, vector<2x128xf32> -> vector<2x128xf32>
    %c0_73 = arith.constant 0 : index
    %c0_74 = arith.constant 0 : index
    %105 = vector.load %arg12[%c0_73, %c0_74] : memref<1x128xf32, #tpu.memory_space<vmem>>, vector<1x128xf32>
    %106 = vector.broadcast %105 : vector<1x128xf32> to vector<2x128xf32>
    %107 = arith.addf %104, %106 : vector<2x128xf32>
    %c0_75 = arith.constant 0 : index
    %c0_76 = arith.constant 0 : index
    %108 = vector.load %arg13[%c0_75, %c0_76] : memref<2x128xf32, #tpu.memory_space<vmem>>, vector<2x128xf32>
    tpu.vector_store %arg13[%c0_75, %c0_76], %107 {strides = array<i32>} : memref<2x128xf32, #tpu.memory_space<vmem>>, vector<2x128xf32>,
    return
  }
}

</mosaic_0001>

<llo_original>
// kernel: network_gnn_forward.1
$region0: #{network_gnn_forward.1}
  #allocation0 [shape = 'u32[]', space=smem, size = 0x4, offset = 0x4, fixed_abs, tag = 'smem constant byte address 0x4 - core index']
  #allocation1 [shape = 'u32[144,128]{1,0:T(1,128)}', space=vmem, size = 0x12000, scoped, tag = 'internal scratch']
  %s0 = inlined_call_operand.vmem [shape: bf16[16,128], index: 0, kind: input, shape index: {}]
  %s1 = inlined_call_operand.vmem [shape: bf16[16,16], index: 1, kind: input, shape index: {}]
  %s2 = inlined_call_operand.vmem [shape: bf16[2,16], index: 2, kind: input, shape index: {}]
  %s3 = inlined_call_operand.vmem [shape: bf16[128,128], index: 3, kind: input, shape index: {}]
  %s4 = inlined_call_operand.vmem [shape: f32[1,128], index: 4, kind: input, shape index: {}]
  %s5 = inlined_call_operand.hbm [shape: bf16[4,128,128], index: 5, kind: input, shape index: {}]
  %s6 = inlined_call_operand.hbm [shape: f32[4,1,128], index: 6, kind: input, shape index: {}]
  %s7 = inlined_call_operand.hbm [shape: bf16[2,128,128], index: 7, kind: input, shape index: {}]
  %s8 = inlined_call_operand.vmem [shape: f32[2,1,128], index: 8, kind: input, shape index: {}]
  %s9 = inlined_call_operand.hbm [shape: bf16[128,128], index: 9, kind: input, shape index: {}]
  %s10 = inlined_call_operand.hbm [shape: f32[1,128], index: 10, kind: input, shape index: {}]
  %s11 = inlined_call_operand.hbm [shape: bf16[128,128], index: 11, kind: input, shape index: {}]
  %s12 = inlined_call_operand.hbm [shape: f32[1,128], index: 12, kind: input, shape index: {}]
  %s13 = inlined_call_operand.hbm [shape: f32[2,128], index: 13, kind: output, shape index: {}]
  %s14 = sld [smem:[#allocation0]]
  $region90: #{network_gnn_forward.1} parent=0
    _
  %s16 = ssub.s32 1, %s14
  %s17 = scalar_select 0, %s16, %s14
  $region1: #{network_gnn_forward.1} parent=0
    #allocation2 [shape = 'u8[131072]{0}', space=vmem, size = 0x20000, scoped, tag = 'input window, operand 5, single buffered']
    #allocation3 [shape = 's32[1]{0}', space=sflag, size = 0x4, scoped, tag = 'scoped memory for network_gnn_forward.1']
    #allocation4 [shape = 's32[1]{0}', space=sflag, size = 0x4, scoped, tag = 'scoped memory for network_gnn_forward.1']
    #allocation5 [shape = 'u8[2048]{0}', space=vmem, size = 0x800, scoped, tag = 'input window, operand 6, single buffered']
    #allocation6 [shape = 's32[1]{0}', space=sflag, size = 0x4, scoped, tag = 'scoped memory for network_gnn_forward.1']
    #allocation7 [shape = 'u8[65536]{0}', space=vmem, size = 0x10000, scoped, tag = 'input window, operand 7, single buffered']
    #allocation8 [shape = 'u8[32768]{0}', space=vmem, size = 0x8000, scoped, tag = 'input window, operand 9, single buffered']
    #allocation9 [shape = 's32[1]{0}', space=sflag, size = 0x4, scoped, tag = 'scoped memory for network_gnn_forward.1']
    #allocation10 [shape = 'u8[512]{0}', space=vmem, size = 0x400, scoped, tag = 'input window, operand 10, single buffered']
    #allocation11 [shape = 'u8[32768]{0}', space=vmem, size = 0x8000, scoped, tag = 'input window, operand 11, single buffered']
    #allocation12 [shape = 's32[1]{0}', space=sflag, size = 0x4, scoped, tag = 'scoped memory for network_gnn_forward.1']
    #allocation13 [shape = 'u8[512]{0}', space=vmem, size = 0x400, scoped, tag = 'input window, operand 12, single buffered']
    #allocation14 [shape = 'u8[1024]{0}', space=vmem, size = 0x400, scoped, tag = 'output window, operand 0, single buffered']
    %18 = vsyncpa [#allocation3], 0
    %19 = vsyncpa [#allocation6], 0
    %20 = vsyncpa [#allocation9], 0
    %21 = vsyncpa [#allocation12], 0
    %22 = vsyncpa [#allocation4], 0
    // Predicated region
    $region2: #{network_gnn_forward.1} parent=1 // pred_check
      _
    $region3: #{network_gnn_forward.1} parent=1 // pred_check_branch
      %24 = sbr.rel (0) target = $region5
    $region4: #{network_gnn_forward.1} parent=1 // pred_region
      _
    $region5: #{network_gnn_forward.1} parent=1 // pred_fallthru
      _
    // Predicated region
    $region6: #{network_gnn_forward.1} parent=1 // pred_check
      _
    $region7: #{network_gnn_forward.1} parent=1 // pred_check_branch
      %26 = sbr.rel (0) target = $region9
    $region8: #{network_gnn_forward.1} parent=1 // pred_region
      _
    $region9: #{network_gnn_forward.1} parent=1 // pred_fallthru
      _
    // Predicated region
    $region10: #{network_gnn_forward.1} parent=1 // pred_check
      _
    $region11: #{network_gnn_forward.1} parent=1 // pred_check_branch
      %28 = sbr.rel (0) target = $region13
    $region12: #{network_gnn_forward.1} parent=1 // pred_region
      _
    $region13: #{network_gnn_forward.1} parent=1 // pred_fallthru
      _
    // Predicated region
    $region14: #{network_gnn_forward.1} parent=1 // pred_check
      _
    $region15: #{network_gnn_forward.1} parent=1 // pred_check_branch
      %30 = sbr.rel (0) target = $region17
    $region16: #{network_gnn_forward.1} parent=1 // pred_region
      _
    $region17: #{network_gnn_forward.1} parent=1 // pred_fallthru
      _
    // Predicated region
    $region18: #{network_gnn_forward.1} parent=1 // pred_check
      _
    $region19: #{network_gnn_forward.1} parent=1 // pred_check_branch
      %32 = sbr.rel (0) target = $region21
    $region20: #{network_gnn_forward.1} parent=1 // pred_region
      _
    $region21: #{network_gnn_forward.1} parent=1 // pred_fallthru
      _
    // Predicated region
    $region22: #{network_gnn_forward.1} parent=1 // pred_check
      _
    $region23: #{network_gnn_forward.1} parent=1 // pred_check_branch
      %34 = sbr.rel (0) target = $region25
    $region24: #{network_gnn_forward.1} parent=1 // pred_region
      %s36 = ssub.s32 4096, 4096
      %37 = vsyncadd [#allocation3], %s36
      %s38 = sshll.u32 [#allocation2], 4
      %s39 = int_to_ptr.vmem [resolvable:$true] %s38
      %44 = dma.hbm_to_vmem [thread:$0]  %s5, 4096, %s39, [#allocation3], 64, 64, 4
    $region25: #{network_gnn_forward.1} parent=1 // pred_fallthru
      _
    // Predicated region
    $region26: #{network_gnn_forward.1} parent=1 // pred_check
      _
    $region27: #{network_gnn_forward.1} parent=1 // pred_check_branch
      %46 = sbr.rel (0) target = $region29
    $region28: #{network_gnn_forward.1} parent=1 // pred_region
      %s48 = ssub.s32 64, 64
      %49 = vsyncadd [#allocation6], %s48
      %s50 = sshll.u32 [#allocation5], 4
      %s51 = int_to_ptr.vmem [resolvable:$true] %s50
      %56 = dma.hbm_to_vmem [thread:$0]  %s6, 64, %s51, [#allocation6], 16, 16, 1
    $region29: #{network_gnn_forward.1} parent=1 // pred_fallthru
      _
    // Predicated region
    $region30: #{network_gnn_forward.1} parent=1 // pred_check
      _
    $region31: #{network_gnn_forward.1} parent=1 // pred_check_branch
      %58 = sbr.rel (0) target = $region33
    $region32: #{network_gnn_forward.1} parent=1 // pred_region
      %s60 = ssub.s32 2048, 2048
      %61 = vsyncadd [#allocation6], %s60
      %s62 = sshll.u32 [#allocation7], 4
      %s63 = int_to_ptr.vmem [resolvable:$true] %s62
      %68 = dma.hbm_to_vmem [thread:$0]  %s7, 2048, %s63, [#allocation6], 64, 64, 4
    $region33: #{network_gnn_forward.1} parent=1 // pred_fallthru
      _
    // Predicated region
    $region34: #{network_gnn_forward.1} parent=1 // pred_check
      _
    $region35: #{network_gnn_forward.1} parent=1 // pred_check_branch
      %70 = sbr.rel (0) target = $region37
    $region36: #{network_gnn_forward.1} parent=1 // pred_region
      _
    $region37: #{network_gnn_forward.1} parent=1 // pred_fallthru
      _
    // Predicated region
    $region38: #{network_gnn_forward.1} parent=1 // pred_check
      _
    $region39: #{network_gnn_forward.1} parent=1 // pred_check_branch
      %72 = sbr.rel (0) target = $region41
    $region40: #{network_gnn_forward.1} parent=1 // pred_region
      %s74 = ssub.s32 1024, 1024
      %75 = vsyncadd [#allocation9], %s74
      %s76 = sshll.u32 [#allocation8], 4
      %s77 = int_to_ptr.vmem [resolvable:$true] %s76
      %82 = dma.hbm_to_vmem [thread:$0]  %s9, 1024, %s77, [#allocation9], 64, 64, 4
    $region41: #{network_gnn_forward.1} parent=1 // pred_fallthru
      _
    // Predicated region
    $region42: #{network_gnn_forward.1} parent=1 // pred_check
      _
    $region43: #{network_gnn_forward.1} parent=1 // pred_check_branch
      %84 = sbr.rel (0) target = $region45
    $region44: #{network_gnn_forward.1} parent=1 // pred_region
      %s86 = ssub.s32 16, 16
      %87 = vsyncadd [#allocation9], %s86
      %s89 = sshll.u32 [#allocation10], 4
      %s90 = int_to_ptr.vmem [resolvable:$true] %s89
      %92 = dma.hbm_to_vmem [thread:$0]  %s10, 16, %s90, [#allocation9]
    $region45: #{network_gnn_forward.1} parent=1 // pred_fallthru
      _
    // Predicated region
    $region46: #{network_gnn_forward.1} parent=1 // pred_check
      _
    $region47: #{network_gnn_forward.1} parent=1 // pred_check_branch
      %94 = sbr.rel (0) target = $region49
    $region48: #{network_gnn_forward.1} parent=1 // pred_region
      %s96 = ssub.s32 1024, 1024
      %97 = vsyncadd [#allocation12], %s96
      %s98 = sshll.u32 [#allocation11], 4
      %s99 = int_to_ptr.vmem [resolvable:$true] %s98
      %104 = dma.hbm_to_vmem [thread:$0]  %s11, 1024, %s99, [#allocation12], 64, 64, 4
    $region49: #{network_gnn_forward.1} parent=1 // pred_fallthru
      _
    // Predicated region
    $region50: #{network_gnn_forward.1} parent=1 // pred_check
      _
    $region51: #{network_gnn_forward.1} parent=1 // pred_check_branch
      %106 = sbr.rel (0) target = $region53
    $region52: #{network_gnn_forward.1} parent=1 // pred_region
      %s108 = ssub.s32 16, 16
      %109 = vsyncadd [#allocation12], %s108
      %s111 = sshll.u32 [#allocation13], 4
      %s112 = int_to_ptr.vmem [resolvable:$true] %s111
      %114 = dma.hbm_to_vmem [thread:$0]  %s12, 16, %s112, [#allocation12]
    $region53: #{network_gnn_forward.1} parent=1 // pred_fallthru
      _
    // Predicated region
    $region54: #{network_gnn_forward.1} parent=1 // pred_check
      _
    $region55: #{network_gnn_forward.1} parent=1 // pred_check_branch
      %116 = sbr.rel (0) target = $region57
    $region56: #{network_gnn_forward.1} parent=1 // pred_region
      %117 = dma.done [#allocation3], 4096
    $region57: #{network_gnn_forward.1} parent=1 // pred_fallthru
      _
    // Predicated region
    $region58: #{network_gnn_forward.1} parent=1 // pred_check
      _
    $region59: #{network_gnn_forward.1} parent=1 // pred_check_branch
      %119 = sbr.rel (0) target = $region61
    $region60: #{network_gnn_forward.1} parent=1 // pred_region
      %120 = dma.done [#allocation6], 64
    $region61: #{network_gnn_forward.1} parent=1 // pred_fallthru
      _
    // Predicated region
    $region62: #{network_gnn_forward.1} parent=1 // pred_check
      _
    $region63: #{network_gnn_forward.1} parent=1 // pred_check_branch
      %122 = sbr.rel (0) target = $region65
    $region64: #{network_gnn_forward.1} parent=1 // pred_region
      %123 = dma.done [#allocation6], 2048
    $region65: #{network_gnn_forward.1} parent=1 // pred_fallthru
      _
    // Predicated region
    $region66: #{network_gnn_forward.1} parent=1 // pred_check
      _
    $region67: #{network_gnn_forward.1} parent=1 // pred_check_branch
      %125 = sbr.rel (0) target = $region69
    $region68: #{network_gnn_forward.1} parent=1 // pred_region
      %126 = dma.done [#allocation9], 1024
    $region69: #{network_gnn_forward.1} parent=1 // pred_fallthru
      _
    // Predicated region
    $region70: #{network_gnn_forward.1} parent=1 // pred_check
      _
    $region71: #{network_gnn_forward.1} parent=1 // pred_check_branch
      %128 = sbr.rel (0) target = $region73
    $region72: #{network_gnn_forward.1} parent=1 // pred_region
      %129 = dma.done [#allocation9], 16
    $region73: #{network_gnn_forward.1} parent=1 // pred_fallthru
      _
    // Predicated region
    $region74: #{network_gnn_forward.1} parent=1 // pred_check
      _
    $region75: #{network_gnn_forward.1} parent=1 // pred_check_branch
      %131 = sbr.rel (0) target = $region77
    $region76: #{network_gnn_forward.1} parent=1 // pred_region
      %132 = dma.done [#allocation12], 1024
    $region77: #{network_gnn_forward.1} parent=1 // pred_fallthru
      _
    // Predicated region
    $region78: #{network_gnn_forward.1} parent=1 // pred_check
      _
    $region79: #{network_gnn_forward.1} parent=1 // pred_check_branch
      %134 = sbr.rel (0) target = $region81
    $region80: #{network_gnn_forward.1} parent=1 // pred_region
      %135 = dma.done [#allocation12], 16
    $region81: #{network_gnn_forward.1} parent=1 // pred_fallthru
      _
    %v137 = vld [vmem:[%s1] sm:$0xf]
    %v138 = vld [vmem:[%s1 + $0x4] sm:$0xf]
    %v139 = vld [vmem:[%s0] sm:$0xf]
    %v140 = vld [vmem:[%s0 + $0x4] sm:$0xf]
    %v141 = vld [vmem:[%s3] sm:$0xf]
    %v142 = vld [vmem:[%s3 + $0x4] sm:$0xf]
    %v143 = vld [vmem:[%s3 + $0x8] sm:$0xf]
    %v144 = vld [vmem:[%s3 + $0xc] sm:$0xf]
    %v145 = vld [vmem:[%s3 + $0x10] sm:$0xf]
    %v146 = vld [vmem:[%s3 + $0x14] sm:$0xf]
    %v147 = vld [vmem:[%s3 + $0x18] sm:$0xf]
    %v148 = vld [vmem:[%s3 + $0x1c] sm:$0xf]
    %v149 = vld [vmem:[%s3 + $0x20] sm:$0xf]
    %v150 = vld [vmem:[%s3 + $0x24] sm:$0xf]
    %v151 = vld [vmem:[%s3 + $0x28] sm:$0xf]
    %v152 = vld [vmem:[%s3 + $0x2c] sm:$0xf]
    %v153 = vld [vmem:[%s3 + $0x30] sm:$0xf]
    %v154 = vld [vmem:[%s3 + $0x34] sm:$0xf]
    %v155 = vld [vmem:[%s3 + $0x38] sm:$0xf]
    %v156 = vld [vmem:[%s3 + $0x3c] sm:$0xf]
    %v157 = vld [vmem:[%s4] sm:$0x1]
    %v159 = vlaneseq
    %v160 = vshrl.u32 %v159, 7
    %v161 = vsub.s32 0, %v160
    %v162 = vrot.slane %v157, %v161
    %v166 = vunpack.c.l.b16 %v139
    %v167 = vunpack.c.l.b16 %v140
    %v168 = vpack.c.b16 %v167, %v166
    %v186 = vunpack.c.l.b16 %v141
    %v187 = vunpack.c.l.b16 %v142
    %v188 = vunpack.c.l.b16 %v143
    %v189 = vunpack.c.l.b16 %v144
    %v190 = vunpack.c.l.b16 %v145
    %v191 = vunpack.c.l.b16 %v146
    %v192 = vunpack.c.l.b16 %v147
    %v193 = vunpack.c.l.b16 %v148
    %v194 = vunpack.c.l.b16 %v149
    %v195 = vunpack.c.l.b16 %v150
    %v196 = vunpack.c.l.b16 %v151
    %v197 = vunpack.c.l.b16 %v152
    %v198 = vunpack.c.l.b16 %v153
    %v199 = vunpack.c.l.b16 %v154
    %v200 = vunpack.c.l.b16 %v155
    %v201 = vunpack.c.l.b16 %v156
    %v202 = vpack.c.b16 %v187, %v186
    %v203 = vpack.c.b16 %v189, %v188
    %v204 = vpack.c.b16 %v191, %v190
    %v205 = vpack.c.b16 %v193, %v192
    %v206 = vpack.c.b16 %v195, %v194
    %v207 = vpack.c.b16 %v197, %v196
    %v208 = vpack.c.b16 %v199, %v198
    %v209 = vpack.c.b16 %v201, %v200
    %218 = vmatprep.subr.bf16.mxu0 0
    %219 = vmatpush1.bf16.msra.mxu0 %v202
    %220 = vmatprep.subr.bf16.mxu0 0
    %221 = vmatpush1.bf16.msra.mxu0 %v203
    %222 = vmatprep.subr.bf16.mxu0 0
    %223 = vmatpush1.bf16.msra.mxu0 %v204
    %224 = vmatprep.subr.bf16.mxu0 0
    %225 = vmatpush1.bf16.msra.mxu0 %v205
    %226 = vmatprep.subr.bf16.mxu0 0
    %227 = vmatpush1.bf16.msra.mxu0 %v206
    %228 = vmatprep.subr.bf16.mxu0 0
    %229 = vmatpush1.bf16.msra.mxu0 %v207
    %230 = vmatprep.subr.bf16.mxu0 0
    %231 = vmatpush1.bf16.msra.mxu0 %v208
    %232 = vmatprep.subr.bf16.mxu0 0
    %233 = vmatpush1.bf16.msra.mxu0 %v209
    %234 = vmatprep.subr.bf16.mxu0 0
    %235 = vmatpush1.bf16.msra.mxu0 0
    %236 = vmatprep.subr.bf16.mxu0 0
    %237 = vmatpush1.bf16.msra.mxu0 0
    %238 = vmatprep.subr.bf16.mxu0 0
    %239 = vmatpush1.bf16.msra.mxu0 0
    %240 = vmatprep.subr.bf16.mxu0 0
    %241 = vmatpush1.bf16.msra.mxu0 0
    %242 = vmatprep.subr.bf16.mxu0 0
    %243 = vmatpush1.bf16.msra.mxu0 0
    %244 = vmatprep.subr.bf16.mxu0 0
    %245 = vmatpush1.bf16.msra.mxu0 0
    %246 = vmatprep.subr.bf16.mxu0 0
    %247 = vmatpush1.bf16.msra.mxu0 0
    %248 = vmatprep.subr.bf16.mxu0 0
    %249 = vmatpush1.bf16.msra.mxu0 0
    %250 = vmatprep.mubr.bf16.mxu0 0
    %251 = vmatmul.mubr.bf16.gmra.mrb[0].mxu0 %v168
    %v252 = vpop.f32.mrb[0].mxu0
    %v253 = vadd.f32 %v162, %v252
    %v254 = vpop.f32.mrb[0].mxu0
    %v255 = vpop.f32.mrb[0].mxu0
    %v256 = vadd.f32 %v162, %v255
    %v257 = vpop.f32.mrb[0].mxu0
    %258 = vdwg.mxu0
    %v259 = vmax.f32 %v253, 0.0
    %v260 = vmax.f32 %v256, 0.0
    %v261 = vld [vmem:[#allocation2] sm:$0xf]
    %v262 = vld [vmem:[#allocation2 + $0x4] sm:$0xf]
    %v263 = vld [vmem:[#allocation2 + $0x8] sm:$0xf]
    %v264 = vld [vmem:[#allocation2 + $0xc] sm:$0xf]
    %v265 = vld [vmem:[#allocation2 + $0x10] sm:$0xf]
    %v266 = vld [vmem:[#allocation2 + $0x14] sm:$0xf]
    %v267 = vld [vmem:[#allocation2 + $0x18] sm:$0xf]
    %v268 = vld [vmem:[#allocation2 + $0x1c] sm:$0xf]
    %v269 = vld [vmem:[#allocation2 + $0x20] sm:$0xf]
    %v270 = vld [vmem:[#allocation2 + $0x24] sm:$0xf]
    %v271 = vld [vmem:[#allocation2 + $0x28] sm:$0xf]
    %v272 = vld [vmem:[#allocation2 + $0x2c] sm:$0xf]
    %v273 = vld [vmem:[#allocation2 + $0x30] sm:$0xf]
    %v274 = vld [vmem:[#allocation2 + $0x34] sm:$0xf]
    %v275 = vld [vmem:[#allocation2 + $0x38] sm:$0xf]
    %v276 = vld [vmem:[#allocation2 + $0x3c] sm:$0xf]
    %v277 = vld [vmem:[#allocation5] sm:$0x1]
    %v278 = vpack.c.bf16 %v260, %v259
    %v295 = vunpack.c.l.b16 %v261
    %v296 = vunpack.c.l.b16 %v262
    %v297 = vunpack.c.l.b16 %v263
    %v298 = vunpack.c.l.b16 %v264
    %v299 = vunpack.c.l.b16 %v265
    %v300 = vunpack.c.l.b16 %v266
    %v301 = vunpack.c.l.b16 %v267
    %v302 = vunpack.c.l.b16 %v268
    %v303 = vunpack.c.l.b16 %v269
    %v304 = vunpack.c.l.b16 %v270
    %v305 = vunpack.c.l.b16 %v271
    %v306 = vunpack.c.l.b16 %v272
    %v307 = vunpack.c.l.b16 %v273
    %v308 = vunpack.c.l.b16 %v274
    %v309 = vunpack.c.l.b16 %v275
    %v310 = vunpack.c.l.b16 %v276
    %v311 = vpack.c.b16 %v296, %v295
    %v312 = vpack.c.b16 %v298, %v297
    %v313 = vpack.c.b16 %v300, %v299
    %v314 = vpack.c.b16 %v302, %v301
    %v315 = vpack.c.b16 %v304, %v303
    %v316 = vpack.c.b16 %v306, %v305
    %v317 = vpack.c.b16 %v308, %v307
    %v318 = vpack.c.b16 %v310, %v309
    %327 = vmatprep.subr.bf16.mxu0 0
    %328 = vmatpush1.bf16.msra.mxu0 %v311
    %329 = vmatprep.subr.bf16.mxu0 0
    %330 = vmatpush1.bf16.msra.mxu0 %v312
    %331 = vmatprep.subr.bf16.mxu0 0
    %332 = vmatpush1.bf16.msra.mxu0 %v313
    %333 = vmatprep.subr.bf16.mxu0 0
    %334 = vmatpush1.bf16.msra.mxu0 %v314
    %335 = vmatprep.subr.bf16.mxu0 0
    %336 = vmatpush1.bf16.msra.mxu0 %v315
    %337 = vmatprep.subr.bf16.mxu0 0
    %338 = vmatpush1.bf16.msra.mxu0 %v316
    %339 = vmatprep.subr.bf16.mxu0 0
    %340 = vmatpush1.bf16.msra.mxu0 %v317
    %341 = vmatprep.subr.bf16.mxu0 0
    %342 = vmatpush1.bf16.msra.mxu0 %v318
    %343 = vmatprep.subr.bf16.mxu0 0
    %344 = vmatpush1.bf16.msra.mxu0 0
    %345 = vmatprep.subr.bf16.mxu0 0
    %346 = vmatpush1.bf16.msra.mxu0 0
    %347 = vmatprep.subr.bf16.mxu0 0
    %348 = vmatpush1.bf16.msra.mxu0 0
    %349 = vmatprep.subr.bf16.mxu0 0
    %350 = vmatpush1.bf16.msra.mxu0 0
    %351 = vmatprep.subr.bf16.mxu0 0
    %352 = vmatpush1.bf16.msra.mxu0 0
    %353 = vmatprep.subr.bf16.mxu0 0
    %354 = vmatpush1.bf16.msra.mxu0 0
    %355 = vmatprep.subr.bf16.mxu0 0
    %356 = vmatpush1.bf16.msra.mxu0 0
    %357 = vmatprep.subr.bf16.mxu0 0
    %358 = vmatpush1.bf16.msra.mxu0 0
    %359 = vmatprep.mubr.bf16.mxu0 0
    %360 = vmatmul.mubr.bf16.gmra.mrb[0].mxu0 %v278
    %v361 = vpop.f32.mrb[0].mxu0
    %v362 = vadd.f32 0.0, %v361
    %v363 = vpop.f32.mrb[0].mxu0
    %v364 = vpop.f32.mrb[0].mxu0
    %v365 = vadd.f32 0.0, %v364
    %v366 = vpop.f32.mrb[0].mxu0
    %367 = vdwg.mxu0
    %v368 = vpack.c.bf16 %v365, %v362
    %v370 = vlaneseq
    %v371 = vshrl.u32 %v370, 7
    %v372 = vsub.s32 0, %v371
    %v373 = vrot.slane %v277, %v372
    %v377 = vunpack.c.l.b16 %v137
    %v378 = vunpack.c.l.b16 %v138
    %v379 = vpack.c.b16 %v378, %v377
    %vm380 = vcmask 130048
    %v382 = vsel %vm380, %v379, 0
    %384 = vmatprep.subr.bf16.mxu0 0
    %385 = vmatpush1.bf16.msra.mxu0 %v368
    %386 = vmatprep.subr.bf16.mxu0 0
    %387 = vmatpush1.bf16.msra.mxu0 0
    %388 = vmatprep.subr.bf16.mxu0 0
    %389 = vmatpush1.bf16.msra.mxu0 0
    %390 = vmatprep.subr.bf16.mxu0 0
    %391 = vmatpush1.bf16.msra.mxu0 0
    %392 = vmatprep.subr.bf16.mxu0 0
    %393 = vmatpush1.bf16.msra.mxu0 0
    %394 = vmatprep.subr.bf16.mxu0 0
    %395 = vmatpush1.bf16.msra.mxu0 0
    %396 = vmatprep.subr.bf16.mxu0 0
    %397 = vmatpush1.bf16.msra.mxu0 0
    %398 = vmatprep.subr.bf16.mxu0 0
    %399 = vmatpush1.bf16.msra.mxu0 0
    %400 = vmatprep.subr.bf16.mxu0 0
    %401 = vmatpush1.bf16.msra.mxu0 0
    %402 = vmatprep.subr.bf16.mxu0 0
    %403 = vmatpush1.bf16.msra.mxu0 0
    %404 = vmatprep.subr.bf16.mxu0 0
    %405 = vmatpush1.bf16.msra.mxu0 0
    %406 = vmatprep.subr.bf16.mxu0 0
    %407 = vmatpush1.bf16.msra.mxu0 0
    %408 = vmatprep.subr.bf16.mxu0 0
    %409 = vmatpush1.bf16.msra.mxu0 0
    %410 = vmatprep.subr.bf16.mxu0 0
    %411 = vmatpush1.bf16.msra.mxu0 0
    %412 = vmatprep.subr.bf16.mxu0 0
    %413 = vmatpush1.bf16.msra.mxu0 0
    %414 = vmatprep.subr.bf16.mxu0 0
    %415 = vmatpush1.bf16.msra.mxu0 0
    %416 = vmatprep.mubr.bf16.mxu0 0
    %417 = vmatmul.mubr.bf16.gmra.mrb[0].mxu0 %v382
    %v418 = vpop.f32.mrb[0].mxu0
    %v419 = vadd.f32 %v373, %v418
    %v420 = vpop.f32.mrb[0].mxu0
    %v421 = vpop.f32.mrb[0].mxu0
    %v422 = vadd.f32 %v373, %v421
    %v423 = vpop.f32.mrb[0].mxu0
    %424 = vdwg.mxu0
    %v425 = vmax.f32 %v419, 0.0
    %v426 = vmax.f32 %v422, 0.0
    %v427 = vadd.f32 %v259, %v425
    %v428 = vadd.f32 %v260, %v426
    %v429 = vmax.f32 %v427, 0.0
    %v430 = vmax.f32 %v428, 0.0
    %s431 = scalar_lea.vmem [#allocation2], 64
    %v432 = vld [vmem:[%s431] sm:$0xf]
    %v433 = vld [vmem:[%s431 + $0x4] sm:$0xf]
    %v434 = vld [vmem:[%s431 + $0x8] sm:$0xf]
    %v435 = vld [vmem:[%s431 + $0xc] sm:$0xf]
    %v436 = vld [vmem:[%s431 + $0x10] sm:$0xf]
    %v437 = vld [vmem:[%s431 + $0x14] sm:$0xf]
    %v438 = vld [vmem:[%s431 + $0x18] sm:$0xf]
    %v439 = vld [vmem:[%s431 + $0x1c] sm:$0xf]
    %v440 = vld [vmem:[%s431 + $0x20] sm:$0xf]
    %v441 = vld [vmem:[%s431 + $0x24] sm:$0xf]
    %v442 = vld [vmem:[%s431 + $0x28] sm:$0xf]
    %v443 = vld [vmem:[%s431 + $0x2c] sm:$0xf]
    %v444 = vld [vmem:[%s431 + $0x30] sm:$0xf]
    %v445 = vld [vmem:[%s431 + $0x34] sm:$0xf]
    %v446 = vld [vmem:[%s431 + $0x38] sm:$0xf]
    %v447 = vld [vmem:[%s431 + $0x3c] sm:$0xf]
    %s448 = scalar_lea.vmem [#allocation5], 1
    %v449 = vld [vmem:[%s448] sm:$0x1]
    %v450 = vpack.c.bf16 %v430, %v429
    %v467 = vunpack.c.l.b16 %v432
    %v468 = vunpack.c.l.b16 %v433
    %v469 = vunpack.c.l.b16 %v434
    %v470 = vunpack.c.l.b16 %v435
    %v471 = vunpack.c.l.b16 %v436
    %v472 = vunpack.c.l.b16 %v437
    %v473 = vunpack.c.l.b16 %v438
    %v474 = vunpack.c.l.b16 %v439
    %v475 = vunpack.c.l.b16 %v440
    %v476 = vunpack.c.l.b16 %v441
    %v477 = vunpack.c.l.b16 %v442
    %v478 = vunpack.c.l.b16 %v443
    %v479 = vunpack.c.l.b16 %v444
    %v480 = vunpack.c.l.b16 %v445
    %v481 = vunpack.c.l.b16 %v446
    %v482 = vunpack.c.l.b16 %v447
    %v483 = vpack.c.b16 %v468, %v467
    %v484 = vpack.c.b16 %v470, %v469
    %v485 = vpack.c.b16 %v472, %v471
    %v486 = vpack.c.b16 %v474, %v473
    %v487 = vpack.c.b16 %v476, %v475
    %v488 = vpack.c.b16 %v478, %v477
    %v489 = vpack.c.b16 %v480, %v479
    %v490 = vpack.c.b16 %v482, %v481
    %499 = vmatprep.subr.bf16.mxu0 0
    %500 = vmatpush1.bf16.msra.mxu0 %v483
    %501 = vmatprep.subr.bf16.mxu0 0
    %502 = vmatpush1.bf16.msra.mxu0 %v484
    %503 = vmatprep.subr.bf16.mxu0 0
    %504 = vmatpush1.bf16.msra.mxu0 %v485
    %505 = vmatprep.subr.bf16.mxu0 0
    %506 = vmatpush1.bf16.msra.mxu0 %v486
    %507 = vmatprep.subr.bf16.mxu0 0
    %508 = vmatpush1.bf16.msra.mxu0 %v487
    %509 = vmatprep.subr.bf16.mxu0 0
    %510 = vmatpush1.bf16.msra.mxu0 %v488
    %511 = vmatprep.subr.bf16.mxu0 0
    %512 = vmatpush1.bf16.msra.mxu0 %v489
    %513 = vmatprep.subr.bf16.mxu0 0
    %514 = vmatpush1.bf16.msra.mxu0 %v490
    %515 = vmatprep.subr.bf16.mxu0 0
    %516 = vmatpush1.bf16.msra.mxu0 0
    %517 = vmatprep.subr.bf16.mxu0 0
    %518 = vmatpush1.bf16.msra.mxu0 0
    %519 = vmatprep.subr.bf16.mxu0 0
    %520 = vmatpush1.bf16.msra.mxu0 0
    %521 = vmatprep.subr.bf16.mxu0 0
    %522 = vmatpush1.bf16.msra.mxu0 0
    %523 = vmatprep.subr.bf16.mxu0 0
    %524 = vmatpush1.bf16.msra.mxu0 0
    %525 = vmatprep.subr.bf16.mxu0 0
    %526 = vmatpush1.bf16.msra.mxu0 0
    %527 = vmatprep.subr.bf16.mxu0 0
    %528 = vmatpush1.bf16.msra.mxu0 0
    %529 = vmatprep.subr.bf16.mxu0 0
    %530 = vmatpush1.bf16.msra.mxu0 0
    %531 = vmatprep.mubr.bf16.mxu0 0
    %532 = vmatmul.mubr.bf16.gmra.mrb[0].mxu0 %v450
    %v533 = vpop.f32.mrb[0].mxu0
    %v534 = vadd.f32 0.0, %v533
    %v535 = vpop.f32.mrb[0].mxu0
    %v536 = vpop.f32.mrb[0].mxu0
    %v537 = vadd.f32 0.0, %v536
    %v538 = vpop.f32.mrb[0].mxu0
    %539 = vdwg.mxu0
    %v540 = vpack.c.bf16 %v537, %v534
    %v542 = vlaneseq
    %v543 = vshrl.u32 %v542, 7
    %v544 = vsub.s32 0, %v543
    %v545 = vrot.slane %v449, %v544
    %547 = vmatprep.subr.bf16.mxu0 0
    %548 = vmatpush1.bf16.msra.mxu0 %v540
    %549 = vmatprep.subr.bf16.mxu0 0
    %550 = vmatpush1.bf16.msra.mxu0 0
    %551 = vmatprep.subr.bf16.mxu0 0
    %552 = vmatpush1.bf16.msra.mxu0 0
    %553 = vmatprep.subr.bf16.mxu0 0
    %554 = vmatpush1.bf16.msra.mxu0 0
    %555 = vmatprep.subr.bf16.mxu0 0
    %556 = vmatpush1.bf16.msra.mxu0 0
    %557 = vmatprep.subr.bf16.mxu0 0
    %558 = vmatpush1.bf16.msra.mxu0 0
    %559 = vmatprep.subr.bf16.mxu0 0
    %560 = vmatpush1.bf16.msra.mxu0 0
    %561 = vmatprep.subr.bf16.mxu0 0
    %562 = vmatpush1.bf16.msra.mxu0 0
    %563 = vmatprep.subr.bf16.mxu0 0
    %564 = vmatpush1.bf16.msra.mxu0 0
    %565 = vmatprep.subr.bf16.mxu0 0
    %566 = vmatpush1.bf16.msra.mxu0 0
    %567 = vmatprep.subr.bf16.mxu0 0
    %568 = vmatpush1.bf16.msra.mxu0 0
    %569 = vmatprep.subr.bf16.mxu0 0
    %570 = vmatpush1.bf16.msra.mxu0 0
    %571 = vmatprep.subr.bf16.mxu0 0
    %572 = vmatpush1.bf16.msra.mxu0 0
    %573 = vmatprep.subr.bf16.mxu0 0
    %574 = vmatpush1.bf16.msra.mxu0 0
    %575 = vmatprep.subr.bf16.mxu0 0
    %576 = vmatpush1.bf16.msra.mxu0 0
    %577 = vmatprep.subr.bf16.mxu0 0
    %578 = vmatpush1.bf16.msra.mxu0 0
    %579 = vmatprep.mubr.bf16.mxu0 0
    %580 = vmatmul.mubr.bf16.gmra.mrb[0].mxu0 %v382
    %v581 = vpop.f32.mrb[0].mxu0
    %v582 = vadd.f32 %v545, %v581
    %v583 = vpop.f32.mrb[0].mxu0
    %v584 = vpop.f32.mrb[0].mxu0
    %v585 = vadd.f32 %v545, %v584
    %v586 = vpop.f32.mrb[0].mxu0
    %587 = vdwg.mxu0
    %v588 = vmax.f32 %v582, 0.0
    %v589 = vmax.f32 %v585, 0.0
    %v590 = vadd.f32 %v427, %v588
    %v591 = vadd.f32 %v428, %v589
    %v592 = vmax.f32 %v590, 0.0
    %v593 = vmax.f32 %v591, 0.0
    %v594 = vld [vmem:[#allocation7] sm:$0xf]
    %v595 = vld [vmem:[#allocation7 + $0x4] sm:$0xf]
    %v596 = vld [vmem:[#allocation7 + $0x8] sm:$0xf]
    %v597 = vld [vmem:[#allocation7 + $0xc] sm:$0xf]
    %v598 = vld [vmem:[#allocation7 + $0x10] sm:$0xf]
    %v599 = vld [vmem:[#allocation7 + $0x14] sm:$0xf]
    %v600 = vld [vmem:[#allocation7 + $0x18] sm:$0xf]
    %v601 = vld [vmem:[#allocation7 + $0x1c] sm:$0xf]
    %v602 = vld [vmem:[#allocation7 + $0x20] sm:$0xf]
    %v603 = vld [vmem:[#allocation7 + $0x24] sm:$0xf]
    %v604 = vld [vmem:[#allocation7 + $0x28] sm:$0xf]
    %v605 = vld [vmem:[#allocation7 + $0x2c] sm:$0xf]
    %v606 = vld [vmem:[#allocation7 + $0x30] sm:$0xf]
    %v607 = vld [vmem:[#allocation7 + $0x34] sm:$0xf]
    %v608 = vld [vmem:[#allocation7 + $0x38] sm:$0xf]
    %v609 = vld [vmem:[#allocation7 + $0x3c] sm:$0xf]
    %v610 = vld [vmem:[%s8] sm:$0x1]
    %v611 = vpack.c.bf16 %v593, %v592
    %v613 = vlaneseq
    %v614 = vshrl.u32 %v613, 7
    %v615 = vsub.s32 0, %v614
    %v616 = vrot.slane %v610, %v615
    %v634 = vunpack.c.l.b16 %v594
    %v635 = vunpack.c.l.b16 %v595
    %v636 = vunpack.c.l.b16 %v596
    %v637 = vunpack.c.l.b16 %v597
    %v638 = vunpack.c.l.b16 %v598
    %v639 = vunpack.c.l.b16 %v599
    %v640 = vunpack.c.l.b16 %v600
    %v641 = vunpack.c.l.b16 %v601
    %v642 = vunpack.c.l.b16 %v602
    %v643 = vunpack.c.l.b16 %v603
    %v644 = vunpack.c.l.b16 %v604
    %v645 = vunpack.c.l.b16 %v605
    %v646 = vunpack.c.l.b16 %v606
    %v647 = vunpack.c.l.b16 %v607
    %v648 = vunpack.c.l.b16 %v608
    %v649 = vunpack.c.l.b16 %v609
    %v650 = vpack.c.b16 %v635, %v634
    %v651 = vpack.c.b16 %v637, %v636
    %v652 = vpack.c.b16 %v639, %v638
    %v653 = vpack.c.b16 %v641, %v640
    %v654 = vpack.c.b16 %v643, %v642
    %v655 = vpack.c.b16 %v645, %v644
    %v656 = vpack.c.b16 %v647, %v646
    %v657 = vpack.c.b16 %v649, %v648
    %666 = vmatprep.subr.bf16.mxu0 0
    %667 = vmatpush1.bf16.msra.mxu0 %v650
    %668 = vmatprep.subr.bf16.mxu0 0
    %669 = vmatpush1.bf16.msra.mxu0 %v651
    %670 = vmatprep.subr.bf16.mxu0 0
    %671 = vmatpush1.bf16.msra.mxu0 %v652
    %672 = vmatprep.subr.bf16.mxu0 0
    %673 = vmatpush1.bf16.msra.mxu0 %v653
    %674 = vmatprep.subr.bf16.mxu0 0
    %675 = vmatpush1.bf16.msra.mxu0 %v654
    %676 = vmatprep.subr.bf16.mxu0 0
    %677 = vmatpush1.bf16.msra.mxu0 %v655
    %678 = vmatprep.subr.bf16.mxu0 0
    %679 = vmatpush1.bf16.msra.mxu0 %v656
    %680 = vmatprep.subr.bf16.mxu0 0
    %681 = vmatpush1.bf16.msra.mxu0 %v657
    %682 = vmatprep.subr.bf16.mxu0 0
    %683 = vmatpush1.bf16.msra.mxu0 0
    %684 = vmatprep.subr.bf16.mxu0 0
    %685 = vmatpush1.bf16.msra.mxu0 0
    %686 = vmatprep.subr.bf16.mxu0 0
    %687 = vmatpush1.bf16.msra.mxu0 0
    %688 = vmatprep.subr.bf16.mxu0 0
    %689 = vmatpush1.bf16.msra.mxu0 0
    %690 = vmatprep.subr.bf16.mxu0 0
    %691 = vmatpush1.bf16.msra.mxu0 0
    %692 = vmatprep.subr.bf16.mxu0 0
    %693 = vmatpush1.bf16.msra.mxu0 0
    %694 = vmatprep.subr.bf16.mxu0 0
    %695 = vmatpush1.bf16.msra.mxu0 0
    %696 = vmatprep.subr.bf16.mxu0 0
    %697 = vmatpush1.bf16.msra.mxu0 0
    %698 = vmatprep.mubr.bf16.mxu0 0
    %699 = vmatmul.mubr.bf16.gmra.mrb[0].mxu0 %v611
    %v700 = vpop.f32.mrb[0].mxu0
    %v701 = vadd.f32 %v616, %v700
    %v702 = vpop.f32.mrb[0].mxu0
    %v703 = vpop.f32.mrb[0].mxu0
    %v704 = vadd.f32 %v616, %v703
    %v705 = vpop.f32.mrb[0].mxu0
    %706 = vdwg.mxu0
    %v707 = vmax.f32 %v701, 0.0
    %v708 = vmax.f32 %v704, 0.0
    %s709 = scalar_lea.vmem [#allocation2], 128
    %v710 = vld [vmem:[%s709] sm:$0xf]
    %v711 = vld [vmem:[%s709 + $0x4] sm:$0xf]
    %v712 = vld [vmem:[%s709 + $0x8] sm:$0xf]
    %v713 = vld [vmem:[%s709 + $0xc] sm:$0xf]
    %v714 = vld [vmem:[%s709 + $0x10] sm:$0xf]
    %v715 = vld [vmem:[%s709 + $0x14] sm:$0xf]
    %v716 = vld [vmem:[%s709 + $0x18] sm:$0xf]
    %v717 = vld [vmem:[%s709 + $0x1c] sm:$0xf]
    %v718 = vld [vmem:[%s709 + $0x20] sm:$0xf]
    %v719 = vld [vmem:[%s709 + $0x24] sm:$0xf]
    %v720 = vld [vmem:[%s709 + $0x28] sm:$0xf]
    %v721 = vld [vmem:[%s709 + $0x2c] sm:$0xf]
    %v722 = vld [vmem:[%s709 + $0x30] sm:$0xf]
    %v723 = vld [vmem:[%s709 + $0x34] sm:$0xf]
    %v724 = vld [vmem:[%s709 + $0x38] sm:$0xf]
    %v725 = vld [vmem:[%s709 + $0x3c] sm:$0xf]
    %s726 = scalar_lea.vmem [#allocation5], 2
    %v727 = vld [vmem:[%s726] sm:$0x1]
    %v728 = vpack.c.bf16 %v708, %v707
    %v745 = vunpack.c.l.b16 %v710
    %v746 = vunpack.c.l.b16 %v711
    %v747 = vunpack.c.l.b16 %v712
    %v748 = vunpack.c.l.b16 %v713
    %v749 = vunpack.c.l.b16 %v714
    %v750 = vunpack.c.l.b16 %v715
    %v751 = vunpack.c.l.b16 %v716
    %v752 = vunpack.c.l.b16 %v717
    %v753 = vunpack.c.l.b16 %v718
    %v754 = vunpack.c.l.b16 %v719
    %v755 = vunpack.c.l.b16 %v720
    %v756 = vunpack.c.l.b16 %v721
    %v757 = vunpack.c.l.b16 %v722
    %v758 = vunpack.c.l.b16 %v723
    %v759 = vunpack.c.l.b16 %v724
    %v760 = vunpack.c.l.b16 %v725
    %v761 = vpack.c.b16 %v746, %v745
    %v762 = vpack.c.b16 %v748, %v747
    %v763 = vpack.c.b16 %v750, %v749
    %v764 = vpack.c.b16 %v752, %v751
    %v765 = vpack.c.b16 %v754, %v753
    %v766 = vpack.c.b16 %v756, %v755
    %v767 = vpack.c.b16 %v758, %v757
    %v768 = vpack.c.b16 %v760, %v759
    %777 = vmatprep.subr.bf16.mxu0 0
    %778 = vmatpush1.bf16.msra.mxu0 %v761
    %779 = vmatprep.subr.bf16.mxu0 0
    %780 = vmatpush1.bf16.msra.mxu0 %v762
    %781 = vmatprep.subr.bf16.mxu0 0
    %782 = vmatpush1.bf16.msra.mxu0 %v763
    %783 = vmatprep.subr.bf16.mxu0 0
    %784 = vmatpush1.bf16.msra.mxu0 %v764
    %785 = vmatprep.subr.bf16.mxu0 0
    %786 = vmatpush1.bf16.msra.mxu0 %v765
    %787 = vmatprep.subr.bf16.mxu0 0
    %788 = vmatpush1.bf16.msra.mxu0 %v766
    %789 = vmatprep.subr.bf16.mxu0 0
    %790 = vmatpush1.bf16.msra.mxu0 %v767
    %791 = vmatprep.subr.bf16.mxu0 0
    %792 = vmatpush1.bf16.msra.mxu0 %v768
    %793 = vmatprep.subr.bf16.mxu0 0
    %794 = vmatpush1.bf16.msra.mxu0 0
    %795 = vmatprep.subr.bf16.mxu0 0
    %796 = vmatpush1.bf16.msra.mxu0 0
    %797 = vmatprep.subr.bf16.mxu0 0
    %798 = vmatpush1.bf16.msra.mxu0 0
    %799 = vmatprep.subr.bf16.mxu0 0
    %800 = vmatpush1.bf16.msra.mxu0 0
    %801 = vmatprep.subr.bf16.mxu0 0
    %802 = vmatpush1.bf16.msra.mxu0 0
    %803 = vmatprep.subr.bf16.mxu0 0
    %804 = vmatpush1.bf16.msra.mxu0 0
    %805 = vmatprep.subr.bf16.mxu0 0
    %806 = vmatpush1.bf16.msra.mxu0 0
    %807 = vmatprep.subr.bf16.mxu0 0
    %808 = vmatpush1.bf16.msra.mxu0 0
    %809 = vmatprep.mubr.bf16.mxu0 0
    %810 = vmatmul.mubr.bf16.gmra.mrb[0].mxu0 %v728
    %v811 = vpop.f32.mrb[0].mxu0
    %v812 = vadd.f32 0.0, %v811
    %v813 = vpop.f32.mrb[0].mxu0
    %v814 = vpop.f32.mrb[0].mxu0
    %v815 = vadd.f32 0.0, %v814
    %v816 = vpop.f32.mrb[0].mxu0
    %817 = vdwg.mxu0
    %v818 = vpack.c.bf16 %v815, %v812
    %v820 = vlaneseq
    %v821 = vshrl.u32 %v820, 7
    %v822 = vsub.s32 0, %v821
    %v823 = vrot.slane %v727, %v822
    %825 = vmatprep.subr.bf16.mxu0 0
    %826 = vmatpush1.bf16.msra.mxu0 %v818
    %827 = vmatprep.subr.bf16.mxu0 0
    %828 = vmatpush1.bf16.msra.mxu0 0
    %829 = vmatprep.subr.bf16.mxu0 0
    %830 = vmatpush1.bf16.msra.mxu0 0
    %831 = vmatprep.subr.bf16.mxu0 0
    %832 = vmatpush1.bf16.msra.mxu0 0
    %833 = vmatprep.subr.bf16.mxu0 0
    %834 = vmatpush1.bf16.msra.mxu0 0
    %835 = vmatprep.subr.bf16.mxu0 0
    %836 = vmatpush1.bf16.msra.mxu0 0
    %837 = vmatprep.subr.bf16.mxu0 0
    %838 = vmatpush1.bf16.msra.mxu0 0
    %839 = vmatprep.subr.bf16.mxu0 0
    %840 = vmatpush1.bf16.msra.mxu0 0
    %841 = vmatprep.subr.bf16.mxu0 0
    %842 = vmatpush1.bf16.msra.mxu0 0
    %843 = vmatprep.subr.bf16.mxu0 0
    %844 = vmatpush1.bf16.msra.mxu0 0
    %845 = vmatprep.subr.bf16.mxu0 0
    %846 = vmatpush1.bf16.msra.mxu0 0
    %847 = vmatprep.subr.bf16.mxu0 0
    %848 = vmatpush1.bf16.msra.mxu0 0
    %849 = vmatprep.subr.bf16.mxu0 0
    %850 = vmatpush1.bf16.msra.mxu0 0
    %851 = vmatprep.subr.bf16.mxu0 0
    %852 = vmatpush1.bf16.msra.mxu0 0
    %853 = vmatprep.subr.bf16.mxu0 0
    %854 = vmatpush1.bf16.msra.mxu0 0
    %855 = vmatprep.subr.bf16.mxu0 0
    %856 = vmatpush1.bf16.msra.mxu0 0
    %857 = vmatprep.mubr.bf16.mxu0 0
    %858 = vmatmul.mubr.bf16.gmra.mrb[0].mxu0 %v382
    %v859 = vpop.f32.mrb[0].mxu0
    %v860 = vadd.f32 %v823, %v859
    %v861 = vpop.f32.mrb[0].mxu0
    %v862 = vpop.f32.mrb[0].mxu0
    %v863 = vadd.f32 %v823, %v862
    %v864 = vpop.f32.mrb[0].mxu0
    %865 = vdwg.mxu0
    %v866 = vmax.f32 %v860, 0.0
    %v867 = vmax.f32 %v863, 0.0
    %v868 = vadd.f32 %v707, %v866
    %v869 = vadd.f32 %v708, %v867
    %v870 = vmax.f32 %v868, 0.0
    %v871 = vmax.f32 %v869, 0.0
    %s872 = scalar_lea.vmem [#allocation2], 192
    %v873 = vld [vmem:[%s872] sm:$0xf]
    %v874 = vld [vmem:[%s872 + $0x4] sm:$0xf]
    %v875 = vld [vmem:[%s872 + $0x8] sm:$0xf]
    %v876 = vld [vmem:[%s872 + $0xc] sm:$0xf]
    %v877 = vld [vmem:[%s872 + $0x10] sm:$0xf]
    %v878 = vld [vmem:[%s872 + $0x14] sm:$0xf]
    %v879 = vld [vmem:[%s872 + $0x18] sm:$0xf]
    %v880 = vld [vmem:[%s872 + $0x1c] sm:$0xf]
    %v881 = vld [vmem:[%s872 + $0x20] sm:$0xf]
    %v882 = vld [vmem:[%s872 + $0x24] sm:$0xf]
    %v883 = vld [vmem:[%s872 + $0x28] sm:$0xf]
    %v884 = vld [vmem:[%s872 + $0x2c] sm:$0xf]
    %v885 = vld [vmem:[%s872 + $0x30] sm:$0xf]
    %v886 = vld [vmem:[%s872 + $0x34] sm:$0xf]
    %v887 = vld [vmem:[%s872 + $0x38] sm:$0xf]
    %v888 = vld [vmem:[%s872 + $0x3c] sm:$0xf]
    %s889 = scalar_lea.vmem [#allocation5], 3
    %v890 = vld [vmem:[%s889] sm:$0x1]
    %v891 = vpack.c.bf16 %v871, %v870
    %v908 = vunpack.c.l.b16 %v873
    %v909 = vunpack.c.l.b16 %v874
    %v910 = vunpack.c.l.b16 %v875
    %v911 = vunpack.c.l.b16 %v876
    %v912 = vunpack.c.l.b16 %v877
    %v913 = vunpack.c.l.b16 %v878
    %v914 = vunpack.c.l.b16 %v879
    %v915 = vunpack.c.l.b16 %v880
    %v916 = vunpack.c.l.b16 %v881
    %v917 = vunpack.c.l.b16 %v882
    %v918 = vunpack.c.l.b16 %v883
    %v919 = vunpack.c.l.b16 %v884
    %v920 = vunpack.c.l.b16 %v885
    %v921 = vunpack.c.l.b16 %v886
    %v922 = vunpack.c.l.b16 %v887
    %v923 = vunpack.c.l.b16 %v888
    %v924 = vpack.c.b16 %v909, %v908
    %v925 = vpack.c.b16 %v911, %v910
    %v926 = vpack.c.b16 %v913, %v912
    %v927 = vpack.c.b16 %v915, %v914
    %v928 = vpack.c.b16 %v917, %v916
    %v929 = vpack.c.b16 %v919, %v918
    %v930 = vpack.c.b16 %v921, %v920
    %v931 = vpack.c.b16 %v923, %v922
    %940 = vmatprep.subr.bf16.mxu0 0
    %941 = vmatpush1.bf16.msra.mxu0 %v924
    %942 = vmatprep.subr.bf16.mxu0 0
    %943 = vmatpush1.bf16.msra.mxu0 %v925
    %944 = vmatprep.subr.bf16.mxu0 0
    %945 = vmatpush1.bf16.msra.mxu0 %v926
    %946 = vmatprep.subr.bf16.mxu0 0
    %947 = vmatpush1.bf16.msra.mxu0 %v927
    %948 = vmatprep.subr.bf16.mxu0 0
    %949 = vmatpush1.bf16.msra.mxu0 %v928
    %950 = vmatprep.subr.bf16.mxu0 0
    %951 = vmatpush1.bf16.msra.mxu0 %v929
    %952 = vmatprep.subr.bf16.mxu0 0
    %953 = vmatpush1.bf16.msra.mxu0 %v930
    %954 = vmatprep.subr.bf16.mxu0 0
    %955 = vmatpush1.bf16.msra.mxu0 %v931
    %956 = vmatprep.subr.bf16.mxu0 0
    %957 = vmatpush1.bf16.msra.mxu0 0
    %958 = vmatprep.subr.bf16.mxu0 0
    %959 = vmatpush1.bf16.msra.mxu0 0
    %960 = vmatprep.subr.bf16.mxu0 0
    %961 = vmatpush1.bf16.msra.mxu0 0
    %962 = vmatprep.subr.bf16.mxu0 0
    %963 = vmatpush1.bf16.msra.mxu0 0
    %964 = vmatprep.subr.bf16.mxu0 0
    %965 = vmatpush1.bf16.msra.mxu0 0
    %966 = vmatprep.subr.bf16.mxu0 0
    %967 = vmatpush1.bf16.msra.mxu0 0
    %968 = vmatprep.subr.bf16.mxu0 0
    %969 = vmatpush1.bf16.msra.mxu0 0
    %970 = vmatprep.subr.bf16.mxu0 0
    %971 = vmatpush1.bf16.msra.mxu0 0
    %972 = vmatprep.mubr.bf16.mxu0 0
    %973 = vmatmul.mubr.bf16.gmra.mrb[0].mxu0 %v891
    %v974 = vpop.f32.mrb[0].mxu0
    %v975 = vadd.f32 0.0, %v974
    %v976 = vpop.f32.mrb[0].mxu0
    %v977 = vpop.f32.mrb[0].mxu0
    %v978 = vadd.f32 0.0, %v977
    %v979 = vpop.f32.mrb[0].mxu0
    %980 = vdwg.mxu0
    %v981 = vpack.c.bf16 %v978, %v975
    %v983 = vlaneseq
    %v984 = vshrl.u32 %v983, 7
    %v985 = vsub.s32 0, %v984
    %v986 = vrot.slane %v890, %v985
    %988 = vmatprep.subr.bf16.mxu0 0
    %989 = vmatpush1.bf16.msra.mxu0 %v981
    %990 = vmatprep.subr.bf16.mxu0 0
    %991 = vmatpush1.bf16.msra.mxu0 0
    %992 = vmatprep.subr.bf16.mxu0 0
    %993 = vmatpush1.bf16.msra.mxu0 0
    %994 = vmatprep.subr.bf16.mxu0 0
    %995 = vmatpush1.bf16.msra.mxu0 0
    %996 = vmatprep.subr.bf16.mxu0 0
    %997 = vmatpush1.bf16.msra.mxu0 0
    %998 = vmatprep.subr.bf16.mxu0 0
    %999 = vmatpush1.bf16.msra.mxu0 0
    %1000 = vmatprep.subr.bf16.mxu0 0
    %1001 = vmatpush1.bf16.msra.mxu0 0
    %1002 = vmatprep.subr.bf16.mxu0 0
    %1003 = vmatpush1.bf16.msra.mxu0 0
    %1004 = vmatprep.subr.bf16.mxu0 0
    %1005 = vmatpush1.bf16.msra.mxu0 0
    %1006 = vmatprep.subr.bf16.mxu0 0
    %1007 = vmatpush1.bf16.msra.mxu0 0
    %1008 = vmatprep.subr.bf16.mxu0 0
    %1009 = vmatpush1.bf16.msra.mxu0 0
    %1010 = vmatprep.subr.bf16.mxu0 0
    %1011 = vmatpush1.bf16.msra.mxu0 0
    %1012 = vmatprep.subr.bf16.mxu0 0
    %1013 = vmatpush1.bf16.msra.mxu0 0
    %1014 = vmatprep.subr.bf16.mxu0 0
    %1015 = vmatpush1.bf16.msra.mxu0 0
    %1016 = vmatprep.subr.bf16.mxu0 0
    %1017 = vmatpush1.bf16.msra.mxu0 0
    %1018 = vmatprep.subr.bf16.mxu0 0
    %1019 = vmatpush1.bf16.msra.mxu0 0
    %1020 = vmatprep.mubr.bf16.mxu0 0
    %1021 = vmatmul.mubr.bf16.gmra.mrb[0].mxu0 %v382
    %v1022 = vpop.f32.mrb[0].mxu0
    %v1023 = vadd.f32 %v986, %v1022
    %v1024 = vpop.f32.mrb[0].mxu0
    %v1025 = vpop.f32.mrb[0].mxu0
    %v1026 = vadd.f32 %v986, %v1025
    %v1027 = vpop.f32.mrb[0].mxu0
    %1028 = vdwg.mxu0
    %v1029 = vmax.f32 %v1023, 0.0
    %v1030 = vmax.f32 %v1026, 0.0
    %v1031 = vadd.f32 %v868, %v1029
    %v1032 = vadd.f32 %v869, %v1030
    %v1033 = vmax.f32 %v1031, 0.0
    %v1034 = vmax.f32 %v1032, 0.0
    %s1035 = scalar_lea.vmem [#allocation7], 64
    %v1036 = vld [vmem:[%s1035] sm:$0xf]
    %v1037 = vld [vmem:[%s1035 + $0x4] sm:$0xf]
    %v1038 = vld [vmem:[%s1035 + $0x8] sm:$0xf]
    %v1039 = vld [vmem:[%s1035 + $0xc] sm:$0xf]
    %v1040 = vld [vmem:[%s1035 + $0x10] sm:$0xf]
    %v1041 = vld [vmem:[%s1035 + $0x14] sm:$0xf]
    %v1042 = vld [vmem:[%s1035 + $0x18] sm:$0xf]
    %v1043 = vld [vmem:[%s1035 + $0x1c] sm:$0xf]
    %v1044 = vld [vmem:[%s1035 + $0x20] sm:$0xf]
    %v1045 = vld [vmem:[%s1035 + $0x24] sm:$0xf]
    %v1046 = vld [vmem:[%s1035 + $0x28] sm:$0xf]
    %v1047 = vld [vmem:[%s1035 + $0x2c] sm:$0xf]
    %v1048 = vld [vmem:[%s1035 + $0x30] sm:$0xf]
    %v1049 = vld [vmem:[%s1035 + $0x34] sm:$0xf]
    %v1050 = vld [vmem:[%s1035 + $0x38] sm:$0xf]
    %v1051 = vld [vmem:[%s1035 + $0x3c] sm:$0xf]
    %s1052 = scalar_lea.vmem %s8, 1
    %v1053 = vld [vmem:[%s1052] sm:$0x1]
    %v1054 = vpack.c.bf16 %v1034, %v1033
    %v1056 = vlaneseq
    %v1057 = vshrl.u32 %v1056, 7
    %v1058 = vsub.s32 0, %v1057
    %v1059 = vrot.slane %v1053, %v1058
    %v1077 = vunpack.c.l.b16 %v1036
    %v1078 = vunpack.c.l.b16 %v1037
    %v1079 = vunpack.c.l.b16 %v1038
    %v1080 = vunpack.c.l.b16 %v1039
    %v1081 = vunpack.c.l.b16 %v1040
    %v1082 = vunpack.c.l.b16 %v1041
    %v1083 = vunpack.c.l.b16 %v1042
    %v1084 = vunpack.c.l.b16 %v1043
    %v1085 = vunpack.c.l.b16 %v1044
    %v1086 = vunpack.c.l.b16 %v1045
    %v1087 = vunpack.c.l.b16 %v1046
    %v1088 = vunpack.c.l.b16 %v1047
    %v1089 = vunpack.c.l.b16 %v1048
    %v1090 = vunpack.c.l.b16 %v1049
    %v1091 = vunpack.c.l.b16 %v1050
    %v1092 = vunpack.c.l.b16 %v1051
    %v1093 = vpack.c.b16 %v1078, %v1077
    %v1094 = vpack.c.b16 %v1080, %v1079
    %v1095 = vpack.c.b16 %v1082, %v1081
    %v1096 = vpack.c.b16 %v1084, %v1083
    %v1097 = vpack.c.b16 %v1086, %v1085
    %v1098 = vpack.c.b16 %v1088, %v1087
    %v1099 = vpack.c.b16 %v1090, %v1089
    %v1100 = vpack.c.b16 %v1092, %v1091
    %1109 = vmatprep.subr.bf16.mxu0 0
    %1110 = vmatpush1.bf16.msra.mxu0 %v1093
    %1111 = vmatprep.subr.bf16.mxu0 0
    %1112 = vmatpush1.bf16.msra.mxu0 %v1094
    %1113 = vmatprep.subr.bf16.mxu0 0
    %1114 = vmatpush1.bf16.msra.mxu0 %v1095
    %1115 = vmatprep.subr.bf16.mxu0 0
    %1116 = vmatpush1.bf16.msra.mxu0 %v1096
    %1117 = vmatprep.subr.bf16.mxu0 0
    %1118 = vmatpush1.bf16.msra.mxu0 %v1097
    %1119 = vmatprep.subr.bf16.mxu0 0
    %1120 = vmatpush1.bf16.msra.mxu0 %v1098
    %1121 = vmatprep.subr.bf16.mxu0 0
    %1122 = vmatpush1.bf16.msra.mxu0 %v1099
    %1123 = vmatprep.subr.bf16.mxu0 0
    %1124 = vmatpush1.bf16.msra.mxu0 %v1100
    %1125 = vmatprep.subr.bf16.mxu0 0
    %1126 = vmatpush1.bf16.msra.mxu0 0
    %1127 = vmatprep.subr.bf16.mxu0 0
    %1128 = vmatpush1.bf16.msra.mxu0 0
    %1129 = vmatprep.subr.bf16.mxu0 0
    %1130 = vmatpush1.bf16.msra.mxu0 0
    %1131 = vmatprep.subr.bf16.mxu0 0
    %1132 = vmatpush1.bf16.msra.mxu0 0
    %1133 = vmatprep.subr.bf16.mxu0 0
    %1134 = vmatpush1.bf16.msra.mxu0 0
    %1135 = vmatprep.subr.bf16.mxu0 0
    %1136 = vmatpush1.bf16.msra.mxu0 0
    %1137 = vmatprep.subr.bf16.mxu0 0
    %1138 = vmatpush1.bf16.msra.mxu0 0
    %1139 = vmatprep.subr.bf16.mxu0 0
    %1140 = vmatpush1.bf16.msra.mxu0 0
    %1141 = vmatprep.mubr.bf16.mxu0 0
    %1142 = vmatmul.mubr.bf16.gmra.mrb[0].mxu0 %v1054
    %v1143 = vpop.f32.mrb[0].mxu0
    %v1144 = vadd.f32 %v1059, %v1143
    %v1145 = vpop.f32.mrb[0].mxu0
    %v1146 = vpop.f32.mrb[0].mxu0
    %v1147 = vadd.f32 %v1059, %v1146
    %v1148 = vpop.f32.mrb[0].mxu0
    %1149 = vdwg.mxu0
    %v1150 = vmax.f32 %v1144, 0.0
    %v1151 = vmax.f32 %v1147, 0.0
    %v1152 = vld [vmem:[%s2] sm:$0x1]
    %v1153 = vpack.c.bf16 %v1151, %v1150
    %v1155 = vsel %vm380, %v1152, 0
    %1157 = vmatprep.subr.bf16.mxu0 0
    %1158 = vmatpush1.bf16.msra.mxu0 %v1153
    %1159 = vmatprep.subr.bf16.mxu0 0
    %1160 = vmatpush1.bf16.msra.mxu0 0
    %1161 = vmatprep.subr.bf16.mxu0 0
    %1162 = vmatpush1.bf16.msra.mxu0 0
    %1163 = vmatprep.subr.bf16.mxu0 0
    %1164 = vmatpush1.bf16.msra.mxu0 0
    %1165 = vmatprep.subr.bf16.mxu0 0
    %1166 = vmatpush1.bf16.msra.mxu0 0
    %1167 = vmatprep.subr.bf16.mxu0 0
    %1168 = vmatpush1.bf16.msra.mxu0 0
    %1169 = vmatprep.subr.bf16.mxu0 0
    %1170 = vmatpush1.bf16.msra.mxu0 0
    %1171 = vmatprep.subr.bf16.mxu0 0
    %1172 = vmatpush1.bf16.msra.mxu0 0
    %1173 = vmatprep.subr.bf16.mxu0 0
    %1174 = vmatpush1.bf16.msra.mxu0 0
    %1175 = vmatprep.subr.bf16.mxu0 0
    %1176 = vmatpush1.bf16.msra.mxu0 0
    %1177 = vmatprep.subr.bf16.mxu0 0
    %1178 = vmatpush1.bf16.msra.mxu0 0
    %1179 = vmatprep.subr.bf16.mxu0 0
    %1180 = vmatpush1.bf16.msra.mxu0 0
    %1181 = vmatprep.subr.bf16.mxu0 0
    %1182 = vmatpush1.bf16.msra.mxu0 0
    %1183 = vmatprep.subr.bf16.mxu0 0
    %1184 = vmatpush1.bf16.msra.mxu0 0
    %1185 = vmatprep.subr.bf16.mxu0 0
    %1186 = vmatpush1.bf16.msra.mxu0 0
    %1187 = vmatprep.subr.bf16.mxu0 0
    %1188 = vmatpush1.bf16.msra.mxu0 0
    %1189 = vmatprep.mubr.bf16.mxu0 0
    %1190 = vmatmul.mubr.bf16.gmra.mrb[0].mxu0 %v1155
    %v1191 = vpop.f32.mrb[0].mxu0
    %v1192 = vadd.f32 0.0, %v1191
    %v1193 = vpop.f32.mrb[0].mxu0
    %v1194 = vpop.f32.mrb[0].mxu0
    %v1195 = vpop.f32.mrb[0].mxu0
    %1196 = vdwg.mxu0
    %v1197 = vld [vmem:[#allocation8] sm:$0xf]
    %v1198 = vld [vmem:[#allocation8 + $0x4] sm:$0xf]
    %v1199 = vld [vmem:[#allocation8 + $0x8] sm:$0xf]
    %v1200 = vld [vmem:[#allocation8 + $0xc] sm:$0xf]
    %v1201 = vld [vmem:[#allocation8 + $0x10] sm:$0xf]
    %v1202 = vld [vmem:[#allocation8 + $0x14] sm:$0xf]
    %v1203 = vld [vmem:[#allocation8 + $0x18] sm:$0xf]
    %v1204 = vld [vmem:[#allocation8 + $0x1c] sm:$0xf]
    %v1205 = vld [vmem:[#allocation8 + $0x20] sm:$0xf]
    %v1206 = vld [vmem:[#allocation8 + $0x24] sm:$0xf]
    %v1207 = vld [vmem:[#allocation8 + $0x28] sm:$0xf]
    %v1208 = vld [vmem:[#allocation8 + $0x2c] sm:$0xf]
    %v1209 = vld [vmem:[#allocation8 + $0x30] sm:$0xf]
    %v1210 = vld [vmem:[#allocation8 + $0x34] sm:$0xf]
    %v1211 = vld [vmem:[#allocation8 + $0x38] sm:$0xf]
    %v1212 = vld [vmem:[#allocation8 + $0x3c] sm:$0xf]
    %v1213 = vpack.c.bf16 %v1192, %v1192
    %v1214 = vld [vmem:[#allocation10] sm:$0x1]
    %v1216 = vlaneseq
    %v1217 = vshrl.u32 %v1216, 7
    %v1218 = vsub.s32 0, %v1217
    %v1219 = vrot.slane %v1214, %v1218
    %v1237 = vunpack.c.l.b16 %v1197
    %v1238 = vunpack.c.l.b16 %v1198
    %v1239 = vunpack.c.l.b16 %v1199
    %v1240 = vunpack.c.l.b16 %v1200
    %v1241 = vunpack.c.l.b16 %v1201
    %v1242 = vunpack.c.l.b16 %v1202
    %v1243 = vunpack.c.l.b16 %v1203
    %v1244 = vunpack.c.l.b16 %v1204
    %v1245 = vunpack.c.l.b16 %v1205
    %v1246 = vunpack.c.l.b16 %v1206
    %v1247 = vunpack.c.l.b16 %v1207
    %v1248 = vunpack.c.l.b16 %v1208
    %v1249 = vunpack.c.l.b16 %v1209
    %v1250 = vunpack.c.l.b16 %v1210
    %v1251 = vunpack.c.l.b16 %v1211
    %v1252 = vunpack.c.l.b16 %v1212
    %v1253 = vpack.c.b16 %v1238, %v1237
    %v1254 = vpack.c.b16 %v1240, %v1239
    %v1255 = vpack.c.b16 %v1242, %v1241
    %v1256 = vpack.c.b16 %v1244, %v1243
    %v1257 = vpack.c.b16 %v1246, %v1245
    %v1258 = vpack.c.b16 %v1248, %v1247
    %v1259 = vpack.c.b16 %v1250, %v1249
    %v1260 = vpack.c.b16 %v1252, %v1251
    %1269 = vmatprep.subr.bf16.mxu0 0
    %1270 = vmatpush1.bf16.msra.mxu0 %v1253
    %1271 = vmatprep.subr.bf16.mxu0 0
    %1272 = vmatpush1.bf16.msra.mxu0 %v1254
    %1273 = vmatprep.subr.bf16.mxu0 0
    %1274 = vmatpush1.bf16.msra.mxu0 %v1255
    %1275 = vmatprep.subr.bf16.mxu0 0
    %1276 = vmatpush1.bf16.msra.mxu0 %v1256
    %1277 = vmatprep.subr.bf16.mxu0 0
    %1278 = vmatpush1.bf16.msra.mxu0 %v1257
    %1279 = vmatprep.subr.bf16.mxu0 0
    %1280 = vmatpush1.bf16.msra.mxu0 %v1258
    %1281 = vmatprep.subr.bf16.mxu0 0
    %1282 = vmatpush1.bf16.msra.mxu0 %v1259
    %1283 = vmatprep.subr.bf16.mxu0 0
    %1284 = vmatpush1.bf16.msra.mxu0 %v1260
    %1285 = vmatprep.subr.bf16.mxu0 0
    %1286 = vmatpush1.bf16.msra.mxu0 0
    %1287 = vmatprep.subr.bf16.mxu0 0
    %1288 = vmatpush1.bf16.msra.mxu0 0
    %1289 = vmatprep.subr.bf16.mxu0 0
    %1290 = vmatpush1.bf16.msra.mxu0 0
    %1291 = vmatprep.subr.bf16.mxu0 0
    %1292 = vmatpush1.bf16.msra.mxu0 0
    %1293 = vmatprep.subr.bf16.mxu0 0
    %1294 = vmatpush1.bf16.msra.mxu0 0
    %1295 = vmatprep.subr.bf16.mxu0 0
    %1296 = vmatpush1.bf16.msra.mxu0 0
    %1297 = vmatprep.subr.bf16.mxu0 0
    %1298 = vmatpush1.bf16.msra.mxu0 0
    %1299 = vmatprep.subr.bf16.mxu0 0
    %1300 = vmatpush1.bf16.msra.mxu0 0
    %1301 = vmatprep.mubr.bf16.mxu0 0
    %1302 = vmatmul.mubr.bf16.gmra.mrb[0].mxu0 %v1213
    %v1303 = vpop.f32.mrb[0].mxu0
    %v1304 = vadd.f32 %v1219, %v1303
    %v1305 = vpop.f32.mrb[0].mxu0
    %v1306 = vpop.f32.mrb[0].mxu0
    %v1307 = vpop.f32.mrb[0].mxu0
    %1308 = vdwg.mxu0
    %v1309 = vmax.f32 %v1304, 0.0
    %v1310 = vld [vmem:[#allocation11] sm:$0xf]
    %v1311 = vld [vmem:[#allocation11 + $0x4] sm:$0xf]
    %v1312 = vld [vmem:[#allocation11 + $0x8] sm:$0xf]
    %v1313 = vld [vmem:[#allocation11 + $0xc] sm:$0xf]
    %v1314 = vld [vmem:[#allocation11 + $0x10] sm:$0xf]
    %v1315 = vld [vmem:[#allocation11 + $0x14] sm:$0xf]
    %v1316 = vld [vmem:[#allocation11 + $0x18] sm:$0xf]
    %v1317 = vld [vmem:[#allocation11 + $0x1c] sm:$0xf]
    %v1318 = vld [vmem:[#allocation11 + $0x20] sm:$0xf]
    %v1319 = vld [vmem:[#allocation11 + $0x24] sm:$0xf]
    %v1320 = vld [vmem:[#allocation11 + $0x28] sm:$0xf]
    %v1321 = vld [vmem:[#allocation11 + $0x2c] sm:$0xf]
    %v1322 = vld [vmem:[#allocation11 + $0x30] sm:$0xf]
    %v1323 = vld [vmem:[#allocation11 + $0x34] sm:$0xf]
    %v1324 = vld [vmem:[#allocation11 + $0x38] sm:$0xf]
    %v1325 = vld [vmem:[#allocation11 + $0x3c] sm:$0xf]
    %v1326 = vpack.c.bf16 %v1309, %v1309
    %v1327 = vld [vmem:[#allocation13] sm:$0x1]
    %v1329 = vlaneseq
    %v1330 = vshrl.u32 %v1329, 7
    %v1331 = vsub.s32 0, %v1330
    %v1332 = vrot.slane %v1327, %v1331
    %v1350 = vunpack.c.l.b16 %v1310
    %v1351 = vunpack.c.l.b16 %v1311
    %v1352 = vunpack.c.l.b16 %v1312
    %v1353 = vunpack.c.l.b16 %v1313
    %v1354 = vunpack.c.l.b16 %v1314
    %v1355 = vunpack.c.l.b16 %v1315
    %v1356 = vunpack.c.l.b16 %v1316
    %v1357 = vunpack.c.l.b16 %v1317
    %v1358 = vunpack.c.l.b16 %v1318
    %v1359 = vunpack.c.l.b16 %v1319
    %v1360 = vunpack.c.l.b16 %v1320
    %v1361 = vunpack.c.l.b16 %v1321
    %v1362 = vunpack.c.l.b16 %v1322
    %v1363 = vunpack.c.l.b16 %v1323
    %v1364 = vunpack.c.l.b16 %v1324
    %v1365 = vunpack.c.l.b16 %v1325
    %v1366 = vpack.c.b16 %v1351, %v1350
    %v1367 = vpack.c.b16 %v1353, %v1352
    %v1368 = vpack.c.b16 %v1355, %v1354
    %v1369 = vpack.c.b16 %v1357, %v1356
    %v1370 = vpack.c.b16 %v1359, %v1358
    %v1371 = vpack.c.b16 %v1361, %v1360
    %v1372 = vpack.c.b16 %v1363, %v1362
    %v1373 = vpack.c.b16 %v1365, %v1364
    %1382 = vmatprep.subr.bf16.mxu0 0
    %1383 = vmatpush1.bf16.msra.mxu0 %v1366
    %1384 = vmatprep.subr.bf16.mxu0 0
    %1385 = vmatpush1.bf16.msra.mxu0 %v1367
    %1386 = vmatprep.subr.bf16.mxu0 0
    %1387 = vmatpush1.bf16.msra.mxu0 %v1368
    %1388 = vmatprep.subr.bf16.mxu0 0
    %1389 = vmatpush1.bf16.msra.mxu0 %v1369
    %1390 = vmatprep.subr.bf16.mxu0 0
    %1391 = vmatpush1.bf16.msra.mxu0 %v1370
    %1392 = vmatprep.subr.bf16.mxu0 0
    %1393 = vmatpush1.bf16.msra.mxu0 %v1371
    %1394 = vmatprep.subr.bf16.mxu0 0
    %1395 = vmatpush1.bf16.msra.mxu0 %v1372
    %1396 = vmatprep.subr.bf16.mxu0 0
    %1397 = vmatpush1.bf16.msra.mxu0 %v1373
    %1398 = vmatprep.subr.bf16.mxu0 0
    %1399 = vmatpush1.bf16.msra.mxu0 0
    %1400 = vmatprep.subr.bf16.mxu0 0
    %1401 = vmatpush1.bf16.msra.mxu0 0
    %1402 = vmatprep.subr.bf16.mxu0 0
    %1403 = vmatpush1.bf16.msra.mxu0 0
    %1404 = vmatprep.subr.bf16.mxu0 0
    %1405 = vmatpush1.bf16.msra.mxu0 0
    %1406 = vmatprep.subr.bf16.mxu0 0
    %1407 = vmatpush1.bf16.msra.mxu0 0
    %1408 = vmatprep.subr.bf16.mxu0 0
    %1409 = vmatpush1.bf16.msra.mxu0 0
    %1410 = vmatprep.subr.bf16.mxu0 0
    %1411 = vmatpush1.bf16.msra.mxu0 0
    %1412 = vmatprep.subr.bf16.mxu0 0
    %1413 = vmatpush1.bf16.msra.mxu0 0
    %1414 = vmatprep.mubr.bf16.mxu0 0
    %1415 = vmatmul.mubr.bf16.gmra.mrb[0].mxu0 %v1326
    %v1416 = vpop.f32.mrb[0].mxu0
    %v1417 = vadd.f32 %v1332, %v1416
    %v1418 = vpop.f32.mrb[0].mxu0
    %v1419 = vpop.f32.mrb[0].mxu0
    %v1420 = vpop.f32.mrb[0].mxu0
    %1421 = vdwg.mxu0
    %1422 = vst [vmem:[#allocation14] sm:$0x3] %v1417
    // Predicated region
    $region82: #{network_gnn_forward.1} parent=1 // pred_check
      _
    $region83: #{network_gnn_forward.1} parent=1 // pred_check_branch
      %1424 = sbr.rel (0) target = $region85
    $region84: #{network_gnn_forward.1} parent=1 // pred_region
      %s1426 = ssub.s32 32, 32
      %1427 = vsyncadd [#allocation4], %s1426
      %s1429 = sshll.u32 [#allocation14], 4
      %s1430 = int_to_ptr.vmem [resolvable:$true] %s1429
      %1432 = dma.vmem_to_hbm [thread:$0]  %s1430, 32, %s13, [#allocation4]
    $region85: #{network_gnn_forward.1} parent=1 // pred_fallthru
      _
    // Predicated region
    $region86: #{network_gnn_forward.1} parent=1 // pred_check
      _
    $region87: #{network_gnn_forward.1} parent=1 // pred_check_branch
      %1434 = sbr.rel (0) target = $region89
    $region88: #{network_gnn_forward.1} parent=1 // pred_region
      %1435 = dma.done [#allocation4], 32
    $region89: #{network_gnn_forward.1} parent=1 // pred_fallthru
      _
    %1436 = vsyncpa [#allocation3], 1
    %1437 = vsyncpa [#allocation6], 1
    %1438 = vsyncpa [#allocation9], 1
    %1439 = vsyncpa [#allocation12], 1
    %1440 = vsyncpa [#allocation4], 1

</llo_original>
